<compile_context>
chip_gen: v5e
topology: v5e:2x2
jax: 0.10.0
libtpu: 0.0.40
codegen_flags: <defaults>
</compile_context>

<pallas_src>
import math
import numpy as np
import jax
import jax.numpy as jnp
from jax.experimental import pallas as pl
from jax.experimental.pallas import tpu as pltpu

# ----------------------- small, forward-consistent sizes ----------------------
NO_LAYERS = 2            # module default 4 (kept small for the example)
NO_FEATURES = 120        # module default 300; any width is zero-padded to a
                         # multiple of 128 lanes (300 -> 384, here 120 -> 128)
F_PAD = ((NO_FEATURES + 127) // 128) * 128
NPTS_PAD = 8             # 6 unisolvent grid points padded to 8 sublanes
K_PAD = 128              # padded contraction width for the tiny (6, 2) layer 1
TR_MAX = 64              # up to 64 x 128 = 8192 evaluation points per grid step

# Multi-index set Gamma for M=2, degree=2, lp=2; ordering matches canon_basis:
# [1, x0, x0^2, x1, x0*x1, x1^2]
GAMMA = np.array([[0, 0], [1, 0], [2, 0], [0, 1], [1, 1], [0, 2]], dtype=np.int64)
N_COEF = GAMMA.shape[0]  # 6

# TODO(synk): minterpy's Transform tree is not importable here; the unisolvent
# grid is rebuilt from Leja-ordered Chebyshev-Lobatto generating points and the
# l2c transform is the inverse canonical Vandermonde on that grid (identical
# semantics; node ordering may differ from the original package).
GEN_PTS = np.array([-1.0, 1.0, 0.0], dtype=np.float64)
PP = GEN_PTS[GAMMA].astype(np.float32)                                   # (6, 2)
V_GRID = np.prod(PP[:, None, :].astype(np.float64) ** GAMMA[None, :, :], axis=-1)
L2C = np.linalg.inv(V_GRID).astype(np.float32)                           # (6, 6)


# ----------------------------- parameter setup --------------------------------
def init_params(seed=2342):
    """Xavier-normal weights (stored already transposed, i.e. (in, out)), zero bias."""
    key = jax.random.PRNGKey(seed)

    def xavier(k, fi, fo):
        return math.sqrt(2.0 / (fi + fo)) * jax.random.normal(k, (fi, fo), jnp.float32)

    keys = jax.random.split(key, NO_LAYERS + 2)
    w1 = xavier(keys[0], 2, NO_FEATURES)                       # (2, F)
    b1 = jnp.zeros((1, NO_FEATURES), jnp.float32)
    wh = jnp.stack([xavier(keys[1 + l], NO_FEATURES, NO_FEATURES)
                    for l in range(NO_LAYERS)])                # (L, F, F)
    bh = jnp.zeros((NO_LAYERS, 1, NO_FEATURES), jnp.float32)   # (L, 1, F)
    wo = xavier(keys[-1], NO_FEATURES, 1)                      # (F, 1)
    bo = jnp.zeros((1, 1), jnp.float32)
    return dict(w1=w1, b1=b1, wh=wh, bh=bh, wo=wo, bo=bo)


def prepare_kernel_params(raw):
    """One-time (init-time) padding / tiling into lane-aligned kernel constants.

    Hoisted out of the forward so no per-call pad/scatter XLA ops remain.
    The output weight is replicated across all 128 lanes so that each Lagrange
    (and therefore canonical) coefficient row comes out of the MXU already
    lane-broadcast; the eval phase then only needs sublane broadcasts.
    """
    xpp = jnp.zeros((NPTS_PAD, K_PAD), jnp.float32).at[:N_COEF, :2].set(jnp.asarray(PP))
    w1 = jnp.zeros((K_PAD, F_PAD), jnp.float32).at[:2, :NO_FEATURES].set(raw["w1"])
    b1 = jnp.zeros((1, F_PAD), jnp.float32).at[:, :NO_FEATURES].set(raw["b1"])
    wh = (jnp.zeros((NO_LAYERS, F_PAD, F_PAD), jnp.float32)
          .at[:, :NO_FEATURES, :NO_FEATURES].set(raw["wh"]))
    bh = (jnp.zeros((NO_LAYERS, 1, F_PAD), jnp.float32)
          .at[:, :, :NO_FEATURES].set(raw["bh"]))
    wo = (jnp.zeros((F_PAD, 128), jnp.float32)
          .at[:NO_FEATURES, :].set(jnp.tile(raw["wo"], (1, 128))))
    bo = jnp.tile(raw["bo"], (1, 128)).astype(jnp.float32)               # (1, 128)
    return dict(xpp=xpp, w1=w1, b1=b1, wh=wh, bh=bh, wo=wo, bo=bo)


# ------------------------------ fused kernel -----------------------------------
def fused_kernel(norm_ref, xpp_ref, w1_ref, b1_ref, wh_ref, bh_ref, wo_ref,
                 bo_ref, x_ref, o_ref, canon_ref):
    # Phase 1 (grid step 0 only): MLP over the 6 grid points + l2c transform.
    # Result lives in VMEM scratch (each row lane-replicated) across all steps.
    @pl.when(pl.program_id(0) == 0)
    def _():
        h = jnp.tanh(jnp.dot(xpp_ref[...], w1_ref[...],
                             preferred_element_type=jnp.float32) + b1_ref[...])
        for l in range(NO_LAYERS):                              # static unroll
            h = jnp.tanh(jnp.dot(h, wh_ref[l],
                                 preferred_element_type=jnp.float32) + bh_ref[l])
        # Lagrange coefficients, already lane-replicated: row j == coef_j.
        lag = jnp.dot(h, wo_ref[...], preferred_element_type=jnp.float32) + bo_ref[...]
        # transform_l2c with the compile-time-constant L2C matrix, fully
        # unrolled (36 (1,128) FMAs, once per call) -> no tiny K=6 MXU matmul.
        for i_row in range(N_COEF):
            acc = float(L2C[i_row, 0]) * lag[0:1, :]
            for j in range(1, N_COEF):
                acc = acc + float(L2C[i_row, j]) * lag[j:j + 1, :]
            canon_ref[i_row:i_row + 1, :] = acc

    # Phase 2 (every step): affine normalization (FMA, no divide) + Horner eval
    # of the canonical polynomial on a (TR, 128) tile of points.
    s0, t0 = norm_ref[0], norm_ref[1]
    s1, t1 = norm_ref[2], norm_ref[3]
    x0 = x_ref[0] * s0 + t0                                     # (TR, 128)
    x1 = x_ref[1] * s1 + t1
    c0 = canon_ref[0:1, :]
    c1 = canon_ref[1:2, :]
    c2 = canon_ref[2:3, :]
    c3 = canon_ref[3:4, :]
    c4 = canon_ref[4:5, :]
    c5 = canon_ref[5:6, :]
    # c0 + c1 x0 + c2 x0^2 + c3 x1 + c4 x0 x1 + c5 x1^2, factored Horner-style.
    o_ref[...] = c0 + x0 * (c1 + c2 * x0 + c4 * x1) + x1 * (c3 + c5 * x1)


# --------------------------------- wrapper -------------------------------------
def polynomial_forward(x_in, kparams, lb, ub):
    """Equivalent of PolynomialNeuralSolver.forward(x_in): returns (1, noElem)."""
    noelem = x_in.shape[0]
    rows_needed = -(-noelem // 128)
    tr = min(TR_MAX, max(8, ((rows_needed + 7) // 8) * 8))      # sublane-dense tile
    rows = -(-rows_needed // tr) * tr                           # pad to tile multiple
    n_pad = rows * 128

    xp = jnp.pad(x_in.astype(jnp.float32), ((0, n_pad - noelem), (0, 0)))
    xT = xp.T.reshape(2, rows, 128)

    # 2*(x - lb)/(ub - lb) - 1  ==  x*scale + shift  (divides hoisted out of the
    # kernel).  NOTE: like the reference module, no guard against ub == lb.
    scale = (2.0 / (ub - lb)).astype(jnp.float32)
    shift = (-lb * scale - 1.0).astype(jnp.float32)
    norm = jnp.stack([scale[0], shift[0], scale[1], shift[1]])

    def const_spec(shape):
        return pl.BlockSpec(shape, lambda i, _s=shape: (0,) * len(_s))

    y = pl.pallas_call(
        fused_kernel,
        out_shape=jax.ShapeDtypeStruct((rows, 128), jnp.float32),
        grid=(rows // tr,),
        in_specs=[
            pl.BlockSpec(memory_space=pltpu.MemorySpace.SMEM),      # norm consts
            const_spec((NPTS_PAD, K_PAD)),                          # grid points
            const_spec((K_PAD, F_PAD)),                             # w1 (padded)
            const_spec((1, F_PAD)),                                 # b1
            const_spec((NO_LAYERS, F_PAD, F_PAD)),                  # hidden weights
            const_spec((NO_LAYERS, 1, F_PAD)),                      # hidden biases
            const_spec((F_PAD, 128)),                               # wo (lane-replicated)
            const_spec((1, 128)),                                   # bo (lane-replicated)
            pl.BlockSpec((2, tr, 128), lambda i: (0, i, 0)),        # evaluation points
        ],
        out_specs=pl.BlockSpec((tr, 128), lambda i: (i, 0)),
        scratch_shapes=[pltpu.VMEM((NPTS_PAD, 128), jnp.float32)],  # canon coefs
        # "arbitrary": the canonical coefficients are produced at step 0 and
        # carried in VMEM scratch across steps (cross-step dependency), so the
        # point axis cannot be megacore-parallel; the per-step eval is tiny and
        # memory-bound so this costs nothing in practice.
        compiler_params=pltpu.CompilerParams(
            dimension_semantics=("arbitrary",)),
    )(norm, kparams["xpp"], kparams["w1"], kparams["b1"], kparams["wh"],
      kparams["bh"], kparams["wo"], kparams["bo"], xT)

    return y.reshape(1, n_pad)[:, :noelem]


# ------------------------------ pure-JAX reference ----------------------------
def reference_forward(x_in, raw, lb, ub):
    h = jnp.asarray(PP)
    h = jnp.tanh(h @ raw["w1"] + raw["b1"])
    for l in range(NO_LAYERS):
        h = jnp.tanh(h @ raw["wh"][l] + raw["bh"][l])
    lag = h @ raw["wo"] + raw["bo"]                             # (6, 1)
    canon = (jnp.asarray(L2C) @ lag).reshape(1, N_COEF)
    xn = 2.0 * (x_in - lb) / (ub - lb) - 1.0
    x0, x1 = xn[:, 0], xn[:, 1]
    V = jnp.stack([jnp.ones_like(x0), x0, x0 * x0, x1, x0 * x1, x1 * x1], axis=1)
    return canon @ V.T                                          # (1, noElem)


if __name__ == "__main__":
    key = jax.random.PRNGKey(0)
    lb = jnp.array([-2.0, -2.0], jnp.float32)
    ub = jnp.array([2.0, 2.0], jnp.float32)
    # 150x150 coordinate grid (what the module trains/evaluates on); deliberately
    # not a multiple of 128 to exercise the padded-tail path.
    noelem = 150 * 150
    x_in = jax.random.uniform(key, (noelem, 2), jnp.float32, minval=-2.0, maxval=2.0)

    raw = init_params()
    kparams = prepare_kernel_params(raw)    # one-time padding, hoisted from forward

    fwd = jax.jit(polynomial_forward)
    y = jax.block_until_ready(fwd(x_in, kparams, lb, ub))

    assert y.shape == (1, noelem)
    y_ref = reference_forward(x_in, raw, lb, ub)
    err = float(jnp.max(jnp.abs(y - y_ref)))
    assert err < 1e-3, f"max abs err {err}"
    print("KERNEL_OK")
</pallas_src>

<mosaic_0001>
module attributes {stable_mosaic.version = 11 : i64} {
  func.func @fused_kernel(%arg0: i32, %arg1: memref<4xf32, #tpu.memory_space<smem>>, %arg2: memref<8x128xf32, #tpu.memory_space<vmem>>, %arg3: memref<128x128xf32, #tpu.memory_space<vmem>>, %arg4: memref<1x128xf32, #tpu.memory_space<vmem>>, %arg5: memref<2x128x128xf32, #tpu.memory_space<vmem>>, %arg6: memref<2x1x128xf32, #tpu.memory_space<vmem>>, %arg7: memref<128x128xf32, #tpu.memory_space<vmem>>, %arg8: memref<1x128xf32, #tpu.memory_space<vmem>>, %arg9: memref<2x64x128xf32, #tpu.memory_space<vmem>>, %arg10: memref<64x128xf32, #tpu.memory_space<vmem>>, %arg11: memref<8x128xf32, #tpu.memory_space<vmem>>) attributes {dimension_semantics = [#tpu.dimension_semantics<arbitrary>], iteration_bounds = array<i64: 3>, scalar_prefetch = 0 : i64, scratch_operands = 1 : i64, tpu.core_type = #tpu.core_type<tc>, window_params = [{transform_indices = @transform_0, window_bounds = array<i64: 4>}, {pipeline_mode = #tpu.pipeline_mode<synchronous>, transform_indices = @transform_1, window_bounds = array<i64: 8, 128>}, {pipeline_mode = #tpu.pipeline_mode<synchronous>, transform_indices = @transform_2, window_bounds = array<i64: 128, 128>}, {pipeline_mode = #tpu.pipeline_mode<synchronous>, transform_indices = @transform_3, window_bounds = array<i64: 1, 128>}, {pipeline_mode = #tpu.pipeline_mode<synchronous>, transform_indices = @transform_4, window_bounds = array<i64: 2, 128, 128>}, {pipeline_mode = #tpu.pipeline_mode<synchronous>, transform_indices = @transform_5, window_bounds = array<i64: 2, 1, 128>}, {pipeline_mode = #tpu.pipeline_mode<synchronous>, transform_indices = @transform_6, window_bounds = array<i64: 128, 128>}, {pipeline_mode = #tpu.pipeline_mode<synchronous>, transform_indices = @transform_7, window_bounds = array<i64: 1, 128>}, {transform_indices = @transform_8, window_bounds = array<i64: 2, 64, 128>}, {transform_indices = @transform_9, window_bounds = array<i64: 64, 128>}]} {
    %c0_i32 = arith.constant 0 : i32
    %0 = arith.cmpi eq, %arg0, %c0_i32 : i32
    %1 = arith.extui %0 : i1 to i32
    %c0_i32_0 = arith.constant 0 : i32
    %2 = arith.cmpi ne, %1, %c0_i32_0 : i32
    scf.if %2 {
      %c0_19 = arith.constant 0 : index
      %c0_20 = arith.constant 0 : index
      %42 = vector.load %arg2[%c0_19, %c0_20] : memref<8x128xf32, #tpu.memory_space<vmem>>, vector<8x128xf32>
      %c0_21 = arith.constant 0 : index
      %c0_22 = arith.constant 0 : index
      %43 = vector.load %arg3[%c0_21, %c0_22] : memref<128x128xf32, #tpu.memory_space<vmem>>, vector<128x128xf32>
      %cst = arith.constant dense<0.000000e+00> : vector<8x128xf32>
      %44 = tpu.matmul %42, %43, %cst {dimension_numbers = #tpu.dot_dimension_numbers<[1], [0], [0], [1], [0, 0, 1, 1], [], []>} : vector<8x128xf32>, vector<128x128xf32>, vector<8x128xf32> -> vector<8x128xf32>
      %c0_23 = arith.constant 0 : index
      %c0_24 = arith.constant 0 : index
      %45 = vector.load %arg4[%c0_23, %c0_24] : memref<1x128xf32, #tpu.memory_space<vmem>>, vector<1x128xf32>
      %46 = vector.broadcast %45 : vector<1x128xf32> to vector<8x128xf32>
      %47 = arith.addf %44, %46 : vector<8x128xf32>
      %48 = math.tanh %47 : vector<8x128xf32>
      %c0_25 = arith.constant 0 : index
      %c0_26 = arith.constant 0 : index
      %c0_27 = arith.constant 0 : index
      %49 = vector.load %arg5[%c0_25, %c0_26, %c0_27] : memref<2x128x128xf32, #tpu.memory_space<vmem>>, vector<1x128x128xf32>
      %50 = vector.shape_cast %49 : vector<1x128x128xf32> to vector<128x128xf32>
      %cst_28 = arith.constant dense<0.000000e+00> : vector<8x128xf32>
      %51 = tpu.matmul %48, %50, %cst_28 {dimension_numbers = #tpu.dot_dimension_numbers<[1], [0], [0], [1], [0, 0, 1, 1], [], []>} : vector<8x128xf32>, vector<128x128xf32>, vector<8x128xf32> -> vector<8x128xf32>
      %c0_29 = arith.constant 0 : index
      %c0_30 = arith.constant 0 : index
      %c0_31 = arith.constant 0 : index
      %52 = vector.load %arg6[%c0_29, %c0_30, %c0_31] : memref<2x1x128xf32, #tpu.memory_space<vmem>>, vector<1x1x128xf32>
      %53 = vector.shape_cast %52 : vector<1x1x128xf32> to vector<1x128xf32>
      %54 = vector.broadcast %53 : vector<1x128xf32> to vector<8x128xf32>
      %55 = arith.addf %51, %54 : vector<8x128xf32>
      %56 = math.tanh %55 : vector<8x128xf32>
      %c1_32 = arith.constant 1 : index
      %c0_33 = arith.constant 0 : index
      %c0_34 = arith.constant 0 : index
      %57 = vector.load %arg5[%c1_32, %c0_33, %c0_34] : memref<2x128x128xf32, #tpu.memory_space<vmem>>, vector<1x128x128xf32>
      %58 = vector.shape_cast %57 : vector<1x128x128xf32> to vector<128x128xf32>
      %cst_35 = arith.constant dense<0.000000e+00> : vector<8x128xf32>
      %59 = tpu.matmul %56, %58, %cst_35 {dimension_numbers = #tpu.dot_dimension_numbers<[1], [0], [0], [1], [0, 0, 1, 1], [], []>} : vector<8x128xf32>, vector<128x128xf32>, vector<8x128xf32> -> vector<8x128xf32>
      %c1_36 = arith.constant 1 : index
      %c0_37 = arith.constant 0 : index
      %c0_38 = arith.constant 0 : index
      %60 = vector.load %arg6[%c1_36, %c0_37, %c0_38] : memref<2x1x128xf32, #tpu.memory_space<vmem>>, vector<1x1x128xf32>
      %61 = vector.shape_cast %60 : vector<1x1x128xf32> to vector<1x128xf32>
      %62 = vector.broadcast %61 : vector<1x128xf32> to vector<8x128xf32>
      %63 = arith.addf %59, %62 : vector<8x128xf32>
      %64 = math.tanh %63 : vector<8x128xf32>
      %c0_39 = arith.constant 0 : index
      %c0_40 = arith.constant 0 : index
      %65 = vector.load %arg7[%c0_39, %c0_40] : memref<128x128xf32, #tpu.memory_space<vmem>>, vector<128x128xf32>
      %cst_41 = arith.constant dense<0.000000e+00> : vector<8x128xf32>
      %66 = tpu.matmul %64, %65, %cst_41 {dimension_numbers = #tpu.dot_dimension_numbers<[1], [0], [0], [1], [0, 0, 1, 1], [], []>} : vector<8x128xf32>, vector<128x128xf32>, vector<8x128xf32> -> vector<8x128xf32>
      %c0_42 = arith.constant 0 : index
      %c0_43 = arith.constant 0 : index
      %67 = vector.load %arg8[%c0_42, %c0_43] : memref<1x128xf32, #tpu.memory_space<vmem>>, vector<1x128xf32>
      %68 = vector.broadcast %67 : vector<1x128xf32> to vector<8x128xf32>
      %69 = arith.addf %66, %68 : vector<8x128xf32>
      %70 = vector.extract_strided_slice %69 {offsets = [0, 0], sizes = [1, 128], strides = [1, 1]} : vector<8x128xf32> to vector<1x128xf32>
      %cst_44 = arith.constant -7.500000e-01 : f32
      %71 = vector.broadcast %cst_44 : f32 to vector<1x128xf32>
      %72 = arith.mulf %71, %70 : vector<1x128xf32>
      %73 = vector.extract_strided_slice %69 {offsets = [1, 0], sizes = [1, 128], strides = [1, 1]} : vector<8x128xf32> to vector<1x128xf32>
      %cst_45 = arith.constant -2.500000e-01 : f32
      %74 = vector.broadcast %cst_45 : f32 to vector<1x128xf32>
      %75 = arith.mulf %74, %73 : vector<1x128xf32>
      %76 = arith.addf %72, %75 : vector<1x128xf32>
      %77 = vector.extract_strided_slice %69 {offsets = [2, 0], sizes = [1, 128], strides = [1, 1]} : vector<8x128xf32> to vector<1x128xf32>
      %cst_46 = arith.constant 1.000000e+00 : f32
      %78 = vector.broadcast %cst_46 : f32 to vector<1x128xf32>
      %79 = arith.mulf %78, %77 : vector<1x128xf32>
      %80 = arith.addf %76, %79 : vector<1x128xf32>
      %81 = vector.extract_strided_slice %69 {offsets = [3, 0], sizes = [1, 128], strides = [1, 1]} : vector<8x128xf32> to vector<1x128xf32>
      %cst_47 = arith.constant -2.500000e-01 : f32
      %82 = vector.broadcast %cst_47 : f32 to vector<1x128xf32>
      %83 = arith.mulf %82, %81 : vector<1x128xf32>
      %84 = arith.addf %80, %83 : vector<1x128xf32>
      %85 = vector.extract_strided_slice %69 {offsets = [4, 0], sizes = [1, 128], strides = [1, 1]} : vector<8x128xf32> to vector<1x128xf32>
      %cst_48 = arith.constant 2.500000e-01 : f32
      %86 = vector.broadcast %cst_48 : f32 to vector<1x128xf32>
      %87 = arith.mulf %86, %85 : vector<1x128xf32>
      %88 = arith.addf %84, %87 : vector<1x128xf32>
      %89 = vector.extract_strided_slice %69 {offsets = [5, 0], sizes = [1, 128], strides = [1, 1]} : vector<8x128xf32> to vector<1x128xf32>
      %cst_49 = arith.constant 1.000000e+00 : f32
      %90 = vector.broadcast %cst_49 : f32 to vector<1x128xf32>
      %91 = arith.mulf %90, %89 : vector<1x128xf32>
      %92 = arith.addf %88, %91 : vector<1x128xf32>
      %c0_50 = arith.constant 0 : index
      %c0_51 = arith.constant 0 : index
      %93 = vector.load %arg11[%c0_50, %c0_51] : memref<8x128xf32, #tpu.memory_space<vmem>>, vector<1x128xf32>
      tpu.vector_store %arg11[%c0_50, %c0_51], %92 {strides = array<i32>} : memref<8x128xf32, #tpu.memory_space<vmem>>, vector<1x128xf32>,
      %94 = vector.extract_strided_slice %69 {offsets = [0, 0], sizes = [1, 128], strides = [1, 1]} : vector<8x128xf32> to vector<1x128xf32>
      %cst_52 = arith.constant -2.500000e-01 : f32
      %95 = vector.broadcast %cst_52 : f32 to vector<1x128xf32>
      %96 = arith.mulf %95, %94 : vector<1x128xf32>
      %97 = vector.extract_strided_slice %69 {offsets = [1, 0], sizes = [1, 128], strides = [1, 1]} : vector<8x128xf32> to vector<1x128xf32>
      %cst_53 = arith.constant 2.500000e-01 : f32
      %98 = vector.broadcast %cst_53 : f32 to vector<1x128xf32>
      %99 = arith.mulf %98, %97 : vector<1x128xf32>
      %100 = arith.addf %96, %99 : vector<1x128xf32>
      %101 = vector.extract_strided_slice %69 {offsets = [2, 0], sizes = [1, 128], strides = [1, 1]} : vector<8x128xf32> to vector<1x128xf32>
      %cst_54 = arith.constant 0.000000e+00 : f32
      %102 = vector.broadcast %cst_54 : f32 to vector<1x128xf32>
      %103 = arith.mulf %102, %101 : vector<1x128xf32>
      %104 = arith.addf %100, %103 : vector<1x128xf32>
      %105 = vector.extract_strided_slice %69 {offsets = [3, 0], sizes = [1, 128], strides = [1, 1]} : vector<8x128xf32> to vector<1x128xf32>
      %cst_55 = arith.constant -2.500000e-01 : f32
      %106 = vector.broadcast %cst_55 : f32 to vector<1x128xf32>
      %107 = arith.mulf %106, %105 : vector<1x128xf32>
      %108 = arith.addf %104, %107 : vector<1x128xf32>
      %109 = vector.extract_strided_slice %69 {offsets = [4, 0], sizes = [1, 128], strides = [1, 1]} : vector<8x128xf32> to vector<1x128xf32>
      %cst_56 = arith.constant 2.500000e-01 : f32
      %110 = vector.broadcast %cst_56 : f32 to vector<1x128xf32>
      %111 = arith.mulf %110, %109 : vector<1x128xf32>
      %112 = arith.addf %108, %111 : vector<1x128xf32>
      %113 = vector.extract_strided_slice %69 {offsets = [5, 0], sizes = [1, 128], strides = [1, 1]} : vector<8x128xf32> to vector<1x128xf32>
      %cst_57 = arith.constant 0.000000e+00 : f32
      %114 = vector.broadcast %cst_57 : f32 to vector<1x128xf32>
      %115 = arith.mulf %114, %113 : vector<1x128xf32>
      %116 = arith.addf %112, %115 : vector<1x128xf32>
      %c1_58 = arith.constant 1 : index
      %c0_59 = arith.constant 0 : index
      %117 = vector.load %arg11[%c1_58, %c0_59] : memref<8x128xf32, #tpu.memory_space<vmem>>, vector<1x128xf32>
      tpu.vector_store %arg11[%c1_58, %c0_59], %116 {strides = array<i32>} : memref<8x128xf32, #tpu.memory_space<vmem>>, vector<1x128xf32>,
      %118 = vector.extract_strided_slice %69 {offsets = [0, 0], sizes = [1, 128], strides = [1, 1]} : vector<8x128xf32> to vector<1x128xf32>
      %cst_60 = arith.constant 5.000000e-01 : f32
      %119 = vector.broadcast %cst_60 : f32 to vector<1x128xf32>
      %120 = arith.mulf %119, %118 : vector<1x128xf32>
      %121 = vector.extract_strided_slice %69 {offsets = [1, 0], sizes = [1, 128], strides = [1, 1]} : vector<8x128xf32> to vector<1x128xf32>
      %cst_61 = arith.constant 5.000000e-01 : f32
      %122 = vector.broadcast %cst_61 : f32 to vector<1x128xf32>
      %123 = arith.mulf %122, %121 : vector<1x128xf32>
      %124 = arith.addf %120, %123 : vector<1x128xf32>
      %125 = vector.extract_strided_slice %69 {offsets = [2, 0], sizes = [1, 128], strides = [1, 1]} : vector<8x128xf32> to vector<1x128xf32>
      %cst_62 = arith.constant -1.000000e+00 : f32
      %126 = vector.broadcast %cst_62 : f32 to vector<1x128xf32>
      %127 = arith.mulf %126, %125 : vector<1x128xf32>
      %128 = arith.addf %124, %127 : vector<1x128xf32>
      %129 = vector.extract_strided_slice %69 {offsets = [3, 0], sizes = [1, 128], strides = [1, 1]} : vector<8x128xf32> to vector<1x128xf32>
      %cst_63 = arith.constant -0.000000e+00 : f32
      %130 = vector.broadcast %cst_63 : f32 to vector<1x128xf32>
      %131 = arith.mulf %130, %129 : vector<1x128xf32>
      %132 = arith.addf %128, %131 : vector<1x128xf32>
      %133 = vector.extract_strided_slice %69 {offsets = [4, 0], sizes = [1, 128], strides = [1, 1]} : vector<8x128xf32> to vector<1x128xf32>
      %cst_64 = arith.constant -0.000000e+00 : f32
      %134 = vector.broadcast %cst_64 : f32 to vector<1x128xf32>
      %135 = arith.mulf %134, %133 : vector<1x128xf32>
      %136 = arith.addf %132, %135 : vector<1x128xf32>
      %137 = vector.extract_strided_slice %69 {offsets = [5, 0], sizes = [1, 128], strides = [1, 1]} : vector<8x128xf32> to vector<1x128xf32>
      %cst_65 = arith.constant -0.000000e+00 : f32
      %138 = vector.broadcast %cst_65 : f32 to vector<1x128xf32>
      %139 = arith.mulf %138, %137 : vector<1x128xf32>
      %140 = arith.addf %136, %139 : vector<1x128xf32>
      %c2_66 = arith.constant 2 : index
      %c0_67 = arith.constant 0 : index
      %141 = vector.load %arg11[%c2_66, %c0_67] : memref<8x128xf32, #tpu.memory_space<vmem>>, vector<1x128xf32>
      tpu.vector_store %arg11[%c2_66, %c0_67], %140 {strides = array<i32>} : memref<8x128xf32, #tpu.memory_space<vmem>>, vector<1x128xf32>,
      %142 = vector.extract_strided_slice %69 {offsets = [0, 0], sizes = [1, 128], strides = [1, 1]} : vector<8x128xf32> to vector<1x128xf32>
      %cst_68 = arith.constant -2.500000e-01 : f32
      %143 = vector.broadcast %cst_68 : f32 to vector<1x128xf32>
      %144 = arith.mulf %143, %142 : vector<1x128xf32>
      %145 = vector.extract_strided_slice %69 {offsets = [1, 0], sizes = [1, 128], strides = [1, 1]} : vector<8x128xf32> to vector<1x128xf32>
      %cst_69 = arith.constant -2.500000e-01 : f32
      %146 = vector.broadcast %cst_69 : f32 to vector<1x128xf32>
      %147 = arith.mulf %146, %145 : vector<1x128xf32>
      %148 = arith.addf %144, %147 : vector<1x128xf32>
      %149 = vector.extract_strided_slice %69 {offsets = [2, 0], sizes = [1, 128], strides = [1, 1]} : vector<8x128xf32> to vector<1x128xf32>
      %cst_70 = arith.constant 0.000000e+00 : f32
      %150 = vector.broadcast %cst_70 : f32 to vector<1x128xf32>
      %151 = arith.mulf %150, %149 : vector<1x128xf32>
      %152 = arith.addf %148, %151 : vector<1x128xf32>
      %153 = vector.extract_strided_slice %69 {offsets = [3, 0], sizes = [1, 128], strides = [1, 1]} : vector<8x128xf32> to vector<1x128xf32>
      %cst_71 = arith.constant 2.500000e-01 : f32
      %154 = vector.broadcast %cst_71 : f32 to vector<1x128xf32>
      %155 = arith.mulf %154, %153 : vector<1x128xf32>
      %156 = arith.addf %152, %155 : vector<1x128xf32>
      %157 = vector.extract_strided_slice %69 {offsets = [4, 0], sizes = [1, 128], strides = [1, 1]} : vector<8x128xf32> to vector<1x128xf32>
      %cst_72 = arith.constant 2.500000e-01 : f32
      %158 = vector.broadcast %cst_72 : f32 to vector<1x128xf32>
      %159 = arith.mulf %158, %157 : vector<1x128xf32>
      %160 = arith.addf %156, %159 : vector<1x128xf32>
      %161 = vector.extract_strided_slice %69 {offsets = [5, 0], sizes = [1, 128], strides = [1, 1]} : vector<8x128xf32> to vector<1x128xf32>
      %cst_73 = arith.constant 0.000000e+00 : f32
      %162 = vector.broadcast %cst_73 : f32 to vector<1x128xf32>
      %163 = arith.mulf %162, %161 : vector<1x128xf32>
      %164 = arith.addf %160, %163 : vector<1x128xf32>
      %c3_74 = arith.constant 3 : index
      %c0_75 = arith.constant 0 : index
      %165 = vector.load %arg11[%c3_74, %c0_75] : memref<8x128xf32, #tpu.memory_space<vmem>>, vector<1x128xf32>
      tpu.vector_store %arg11[%c3_74, %c0_75], %164 {strides = array<i32>} : memref<8x128xf32, #tpu.memory_space<vmem>>, vector<1x128xf32>,
      %166 = vector.extract_strided_slice %69 {offsets = [0, 0], sizes = [1, 128], strides = [1, 1]} : vector<8x128xf32> to vector<1x128xf32>
      %cst_76 = arith.constant 2.500000e-01 : f32
      %167 = vector.broadcast %cst_76 : f32 to vector<1x128xf32>
      %168 = arith.mulf %167, %166 : vector<1x128xf32>
      %169 = vector.extract_strided_slice %69 {offsets = [1, 0], sizes = [1, 128], strides = [1, 1]} : vector<8x128xf32> to vector<1x128xf32>
      %cst_77 = arith.constant -2.500000e-01 : f32
      %170 = vector.broadcast %cst_77 : f32 to vector<1x128xf32>
      %171 = arith.mulf %170, %169 : vector<1x128xf32>
      %172 = arith.addf %168, %171 : vector<1x128xf32>
      %173 = vector.extract_strided_slice %69 {offsets = [2, 0], sizes = [1, 128], strides = [1, 1]} : vector<8x128xf32> to vector<1x128xf32>
      %cst_78 = arith.constant 0.000000e+00 : f32
      %174 = vector.broadcast %cst_78 : f32 to vector<1x128xf32>
      %175 = arith.mulf %174, %173 : vector<1x128xf32>
      %176 = arith.addf %172, %175 : vector<1x128xf32>
      %177 = vector.extract_strided_slice %69 {offsets = [3, 0], sizes = [1, 128], strides = [1, 1]} : vector<8x128xf32> to vector<1x128xf32>
      %cst_79 = arith.constant -2.500000e-01 : f32
      %178 = vector.broadcast %cst_79 : f32 to vector<1x128xf32>
      %179 = arith.mulf %178, %177 : vector<1x128xf32>
      %180 = arith.addf %176, %179 : vector<1x128xf32>
      %181 = vector.extract_strided_slice %69 {offsets = [4, 0], sizes = [1, 128], strides = [1, 1]} : vector<8x128xf32> to vector<1x128xf32>
      %cst_80 = arith.constant 2.500000e-01 : f32
      %182 = vector.broadcast %cst_80 : f32 to vector<1x128xf32>
      %183 = arith.mulf %182, %181 : vector<1x128xf32>
      %184 = arith.addf %180, %183 : vector<1x128xf32>
      %185 = vector.extract_strided_slice %69 {offsets = [5, 0], sizes = [1, 128], strides = [1, 1]} : vector<8x128xf32> to vector<1x128xf32>
      %cst_81 = arith.constant 0.000000e+00 : f32
      %186 = vector.broadcast %cst_81 : f32 to vector<1x128xf32>
      %187 = arith.mulf %186, %185 : vector<1x128xf32>
      %188 = arith.addf %184, %187 : vector<1x128xf32>
      %c4_82 = arith.constant 4 : index
      %c0_83 = arith.constant 0 : index
      %189 = vector.load %arg11[%c4_82, %c0_83] : memref<8x128xf32, #tpu.memory_space<vmem>>, vector<1x128xf32>
      tpu.vector_store %arg11[%c4_82, %c0_83], %188 {strides = array<i32>} : memref<8x128xf32, #tpu.memory_space<vmem>>, vector<1x128xf32>,
      %190 = vector.extract_strided_slice %69 {offsets = [0, 0], sizes = [1, 128], strides = [1, 1]} : vector<8x128xf32> to vector<1x128xf32>
      %cst_84 = arith.constant 5.000000e-01 : f32
      %191 = vector.broadcast %cst_84 : f32 to vector<1x128xf32>
      %192 = arith.mulf %191, %190 : vector<1x128xf32>
      %193 = vector.extract_strided_slice %69 {offsets = [1, 0], sizes = [1, 128], strides = [1, 1]} : vector<8x128xf32> to vector<1x128xf32>
      %cst_85 = arith.constant -0.000000e+00 : f32
      %194 = vector.broadcast %cst_85 : f32 to vector<1x128xf32>
      %195 = arith.mulf %194, %193 : vector<1x128xf32>
      %196 = arith.addf %192, %195 : vector<1x128xf32>
      %197 = vector.extract_strided_slice %69 {offsets = [2, 0], sizes = [1, 128], strides = [1, 1]} : vector<8x128xf32> to vector<1x128xf32>
      %cst_86 = arith.constant -0.000000e+00 : f32
      %198 = vector.broadcast %cst_86 : f32 to vector<1x128xf32>
      %199 = arith.mulf %198, %197 : vector<1x128xf32>
      %200 = arith.addf %196, %199 : vector<1x128xf32>
      %201 = vector.extract_strided_slice %69 {offsets = [3, 0], sizes = [1, 128], strides = [1, 1]} : vector<8x128xf32> to vector<1x128xf32>
      %cst_87 = arith.constant 5.000000e-01 : f32
      %202 = vector.broadcast %cst_87 : f32 to vector<1x128xf32>
      %203 = arith.mulf %202, %201 : vector<1x128xf32>
      %204 = arith.addf %200, %203 : vector<1x128xf32>
      %205 = vector.extract_strided_slice %69 {offsets = [4, 0], sizes = [1, 128], strides = [1, 1]} : vector<8x128xf32> to vector<1x128xf32>
      %cst_88 = arith.constant -0.000000e+00 : f32
      %206 = vector.broadcast %cst_88 : f32 to vector<1x128xf32>
      %207 = arith.mulf %206, %205 : vector<1x128xf32>
      %208 = arith.addf %204, %207 : vector<1x128xf32>
      %209 = vector.extract_strided_slice %69 {offsets = [5, 0], sizes = [1, 128], strides = [1, 1]} : vector<8x128xf32> to vector<1x128xf32>
      %cst_89 = arith.constant -1.000000e+00 : f32
      %210 = vector.broadcast %cst_89 : f32 to vector<1x128xf32>
      %211 = arith.mulf %210, %209 : vector<1x128xf32>
      %212 = arith.addf %208, %211 : vector<1x128xf32>
      %c5_90 = arith.constant 5 : index
      %c0_91 = arith.constant 0 : index
      %213 = vector.load %arg11[%c5_90, %c0_91] : memref<8x128xf32, #tpu.memory_space<vmem>>, vector<1x128xf32>
      tpu.vector_store %arg11[%c5_90, %c0_91], %212 {strides = array<i32>} : memref<8x128xf32, #tpu.memory_space<vmem>>, vector<1x128xf32>,
    } else {
    }
    %c0 = arith.constant 0 : index
    %3 = memref.load %arg1[%c0] : memref<4xf32, #tpu.memory_space<smem>>
    %c1 = arith.constant 1 : index
    %4 = memref.load %arg1[%c1] : memref<4xf32, #tpu.memory_space<smem>>
    %c2 = arith.constant 2 : index
    %5 = memref.load %arg1[%c2] : memref<4xf32, #tpu.memory_space<smem>>
    %c3 = arith.constant 3 : index
    %6 = memref.load %arg1[%c3] : memref<4xf32, #tpu.memory_space<smem>>
    %c0_1 = arith.constant 0 : index
    %c0_2 = arith.constant 0 : index
    %c0_3 = arith.constant 0 : index
    %7 = vector.load %arg9[%c0_1, %c0_2, %c0_3] : memref<2x64x128xf32, #tpu.memory_space<vmem>>, vector<1x64x128xf32>
    %8 = vector.shape_cast %7 : vector<1x64x128xf32> to vector<64x128xf32>
    %9 = vector.broadcast %3 : f32 to vector<64x128xf32>
    %10 = arith.mulf %8, %9 : vector<64x128xf32>
    %11 = vector.broadcast %4 : f32 to vector<64x128xf32>
    %12 = arith.addf %10, %11 : vector<64x128xf32>
    %c1_4 = arith.constant 1 : index
    %c0_5 = arith.constant 0 : index
    %c0_6 = arith.constant 0 : index
    %13 = vector.load %arg9[%c1_4, %c0_5, %c0_6] : memref<2x64x128xf32, #tpu.memory_space<vmem>>, vector<1x64x128xf32>
    %14 = vector.shape_cast %13 : vector<1x64x128xf32> to vector<64x128xf32>
    %15 = vector.broadcast %5 : f32 to vector<64x128xf32>
    %16 = arith.mulf %14, %15 : vector<64x128xf32>
    %17 = vector.broadcast %6 : f32 to vector<64x128xf32>
    %18 = arith.addf %16, %17 : vector<64x128xf32>
    %c0_7 = arith.constant 0 : index
    %c0_8 = arith.constant 0 : index
    %19 = vector.load %arg11[%c0_7, %c0_8] : memref<8x128xf32, #tpu.memory_space<vmem>>, vector<1x128xf32>
    %c1_9 = arith.constant 1 : index
    %c0_10 = arith.constant 0 : index
    %20 = vector.load %arg11[%c1_9, %c0_10] : memref<8x128xf32, #tpu.memory_space<vmem>>, vector<1x128xf32>
    %c2_11 = arith.constant 2 : index
    %c0_12 = arith.constant 0 : index
    %21 = vector.load %arg11[%c2_11, %c0_12] : memref<8x128xf32, #tpu.memory_space<vmem>>, vector<1x128xf32>
    %c3_13 = arith.constant 3 : index
    %c0_14 = arith.constant 0 : index
    %22 = vector.load %arg11[%c3_13, %c0_14] : memref<8x128xf32, #tpu.memory_space<vmem>>, vector<1x128xf32>
    %c4 = arith.constant 4 : index
    %c0_15 = arith.constant 0 : index
    %23 = vector.load %arg11[%c4, %c0_15] : memref<8x128xf32, #tpu.memory_space<vmem>>, vector<1x128xf32>
    %c5 = arith.constant 5 : index
    %c0_16 = arith.constant 0 : index
    %24 = vector.load %arg11[%c5, %c0_16] : memref<8x128xf32, #tpu.memory_space<vmem>>, vector<1x128xf32>
    %25 = vector.broadcast %21 : vector<1x128xf32> to vector<64x128xf32>
    %26 = arith.mulf %25, %12 : vector<64x128xf32>
    %27 = vector.broadcast %20 : vector<1x128xf32> to vector<64x128xf32>
    %28 = arith.addf %27, %26 : vector<64x128xf32>
    %29 = vector.broadcast %23 : vector<1x128xf32> to vector<64x128xf32>
    %30 = arith.mulf %29, %18 : vector<64x128xf32>
    %31 = arith.addf %28, %30 : vector<64x128xf32>
    %32 = arith.mulf %12, %31 : vector<64x128xf32>
    %33 = vector.broadcast %19 : vector<1x128xf32> to vector<64x128xf32>
    %34 = arith.addf %33, %32 : vector<64x128xf32>
    %35 = vector.broadcast %24 : vector<1x128xf32> to vector<64x128xf32>
    %36 = arith.mulf %35, %18 : vector<64x128xf32>
    %37 = vector.broadcast %22 : vector<1x128xf32> to vector<64x128xf32>
    %38 = arith.addf %37, %36 : vector<64x128xf32>
    %39 = arith.mulf %18, %38 : vector<64x128xf32>
    %40 = arith.addf %34, %39 : vector<64x128xf32>
    %c0_17 = arith.constant 0 : index
    %c0_18 = arith.constant 0 : index
    %41 = vector.load %arg10[%c0_17, %c0_18] : memref<64x128xf32, #tpu.memory_space<vmem>>, vector<64x128xf32>
    tpu.vector_store %arg10[%c0_17, %c0_18], %40 {strides = array<i32>} : memref<64x128xf32, #tpu.memory_space<vmem>>, vector<64x128xf32>,
    return
  }
  func.func @transform_0(%arg0: i32) -> i32 {
    %c0_i32 = arith.constant 0 : i32
    %c0_i32_0 = arith.constant 0 : i32
    return %c0_i32 : i32
  }
  func.func @transform_1(%arg0: i32) -> (i32, i32) {
    %c0_i32 = arith.constant 0 : i32
    %c0_i32_0 = arith.constant 0 : i32
    %c0_i32_1 = arith.constant 0 : i32
    return %c0_i32, %c0_i32_0 : i32, i32
  }
  func.func @transform_2(%arg0: i32) -> (i32, i32) {
    %c0_i32 = arith.constant 0 : i32
    %c0_i32_0 = arith.constant 0 : i32
    %c0_i32_1 = arith.constant 0 : i32
    return %c0_i32, %c0_i32_0 : i32, i32
  }
  func.func @transform_3(%arg0: i32) -> (i32, i32) {
    %c0_i32 = arith.constant 0 : i32
    %c0_i32_0 = arith.constant 0 : i32
    %c0_i32_1 = arith.constant 0 : i32
    return %c0_i32, %c0_i32_0 : i32, i32
  }
  func.func @transform_4(%arg0: i32) -> (i32, i32, i32) {
    %c0_i32 = arith.constant 0 : i32
    %c0_i32_0 = arith.constant 0 : i32
    %c0_i32_1 = arith.constant 0 : i32
    %c0_i32_2 = arith.constant 0 : i32
    return %c0_i32, %c0_i32_0, %c0_i32_1 : i32, i32, i32
  }
  func.func @transform_5(%arg0: i32) -> (i32, i32, i32) {
    %c0_i32 = arith.constant 0 : i32
    %c0_i32_0 = arith.constant 0 : i32
    %c0_i32_1 = arith.constant 0 : i32
    %c0_i32_2 = arith.constant 0 : i32
    return %c0_i32, %c0_i32_0, %c0_i32_1 : i32, i32, i32
  }
  func.func @transform_6(%arg0: i32) -> (i32, i32) {
    %c0_i32 = arith.constant 0 : i32
    %c0_i32_0 = arith.constant 0 : i32
    %c0_i32_1 = arith.constant 0 : i32
    return %c0_i32, %c0_i32_0 : i32, i32
  }
  func.func @transform_7(%arg0: i32) -> (i32, i32) {
    %c0_i32 = arith.constant 0 : i32
    %c0_i32_0 = arith.constant 0 : i32
    %c0_i32_1 = arith.constant 0 : i32
    return %c0_i32, %c0_i32_0 : i32, i32
  }
  func.func @transform_8(%arg0: i32) -> (i32, i32, i32) {
    %c0_i32 = arith.constant 0 : i32
    %c0_i32_0 = arith.constant 0 : i32
    %c0_i32_1 = arith.constant 0 : i32
    return %c0_i32, %arg0, %c0_i32_0 : i32, i32, i32
  }
  func.func @transform_9(%arg0: i32) -> (i32, i32) {
    %c0_i32 = arith.constant 0 : i32
    %c0_i32_0 = arith.constant 0 : i32
    return %arg0, %c0_i32 : i32, i32
  }
}

</mosaic_0001>

<llo_original>
// kernel: polynomial_forward.1
$region0: #{polynomial_forward.1}
  #allocation0 [shape = 'u32[]', space=smem, size = 0x4, offset = 0x4, fixed_abs, tag = 'smem constant byte address 0x4 - core index']
  #allocation1 [shape = 'u32[72,128]{1,0:T(1,128)}', space=vmem, size = 0x9000, scoped, tag = 'internal scratch']
  #allocation2 [shape = 'f32[8,128]{1,0:T(8,128)}', space=vmem, size = 0x1000, scoped, tag = 'scratch operand']
  %s0 = inlined_call_operand.vmem [shape: f32[4], index: 0, kind: input, shape index: {}]
  %s1 = inlined_call_operand.vmem [shape: f32[8,128], index: 1, kind: input, shape index: {}]
  %s2 = inlined_call_operand.vmem [shape: f32[128,128], index: 2, kind: input, shape index: {}]
  %s3 = inlined_call_operand.vmem [shape: f32[1,128], index: 3, kind: input, shape index: {}]
  %s4 = inlined_call_operand.vmem [shape: f32[2,128,128], index: 4, kind: input, shape index: {}]
  %s5 = inlined_call_operand.vmem [shape: f32[2,1,128], index: 5, kind: input, shape index: {}]
  %s6 = inlined_call_operand.vmem [shape: f32[128,128], index: 6, kind: input, shape index: {}]
  %s7 = inlined_call_operand.vmem [shape: f32[1,128], index: 7, kind: input, shape index: {}]
  %s8 = inlined_call_operand.vmem [shape: f32[2,192,128], index: 8, kind: input, shape index: {}]
  %s9 = inlined_call_operand.vmem [shape: f32[192,128], index: 9, kind: output, shape index: {}]
  %s10 = sld [smem:[#allocation0]]
  $region115: #{polynomial_forward.1} parent=0
    _
  %s12 = ssub.s32 1, %s10
  %s13 = scalar_select 0, %s12, %s10
  $region1: #{polynomial_forward.1} parent=0
    #allocation3 [shape = 'u8[512]{0}', space=smem, size = 0x200, scoped, tag = 'input window, operand 0, single buffered']
    #allocation4 [shape = 's32[2]{0}', space=sflag, size = 0x8, scoped, tag = 'scoped memory for polynomial_forward.1']
    #allocation5 [shape = 'u8[131072]{0}', space=vmem, size = 0x20000, scoped, tag = 'input window, operand 8']
    %14 = vsyncpa [#allocation4], 0
    loop: start=0, step=1, limit=5
    $region2: #{polynomial_forward.1} parent=1 // loop_pre_header
      _
    $region3: #{polynomial_forward.1} parent=1 // loop_header
      %s16 = sphi 0, %s20
      %p17 = scmp.ge.s32.totalorder %s16, 5
      %s24 = sphi 0, %s24
      %s26 = sphi 0, %s24
      %s27 = sphi 0, %s26
      %s41 = sphi 0, %s27
      %s45 = sphi 0, %s45
      %s47 = sphi 0, %s45
      %s48 = sphi 0, %s47
      %s62 = sphi 0, %s48
      %s66 = sphi 0, %s66
      %s68 = sphi 0, %s66
      %s69 = sphi 0, %s68
      %s83 = sphi 0, %s69
      %s87 = sphi 0, %s87
      %s89 = sphi 0, %s87
      %s90 = sphi 0, %s89
      %s104 = sphi 0, %s90
      %s108 = sphi 0, %s108
      %s110 = sphi 0, %s108
      %s111 = sphi 0, %s110
      %s125 = sphi 0, %s111
      %s129 = sphi 0, %s129
      %s131 = sphi 0, %s129
      %s132 = sphi 0, %s131
      %s146 = sphi 0, %s132
      %s150 = sphi 0, %s150
      %s152 = sphi 0, %s150
      %s153 = sphi 0, %s152
      %s167 = sphi 0, %s153
      %s171 = sphi 0, %s171
      %s173 = sphi 0, %s171
      %s174 = sphi 0, %s173
      %s188 = sphi 0, %s174
      %s194 = sphi 0, %s196
      %s197 = sphi 0, %s194
      %s198 = sphi 0, %s197
      %s214 = sphi 0, %s198
      %s220 = sphi 0, %s222
      %s223 = sphi 0, %s220
      %s224 = sphi 0, %s223
      %s240 = sphi 0, %s224
    $region4: #{polynomial_forward.1} parent=1 // loop_header_branch
      %19 = sbr.rel (%p17) target = $region8
    $region5: #{polynomial_forward.1} parent=1 // loop_body
      %s21 = ssub.s32 %s16, 1
      %s22 = ssub.s32 %s16, 2
      %s23 = sadd.s32 %s16, 1
      %s25 = sadd.s32 %s24, 1
      %p28 = scmp.eq.s32.totalorder %s16, 2
      %p29 = scmp.ne.s32.totalorder %s24, %s26
      %p30 = scmp.eq.s32.totalorder %s16, 0
      %p31 = por %p29, %p30
      %p32 = scmp.ne.s32.totalorder %s24, %s26
      %p33 = scmp.eq.s32.totalorder %s21, 2
      %p34 = por %p32, %p33
      %p35 = scmp.ne.s32.totalorder %s26, %s27
      %p36 = scmp.eq.s32.totalorder %s21, 0
      %p37 = por %p35, %p36
      %p38 = scmp.ne.s32.totalorder %s26, %s27
      %p39 = scmp.eq.s32.totalorder %s22, 2
      %p40 = por %p38, %p39
      %p42 = scmp.ne.s32.totalorder %s27, %s41
      %p43 = scmp.eq.s32.totalorder %s22, 0
      %p44 = por %p42, %p43
      %s46 = sadd.s32 %s45, 1
      %p49 = scmp.eq.s32.totalorder %s16, 2
      %p50 = scmp.ne.s32.totalorder %s45, %s47
      %p51 = scmp.eq.s32.totalorder %s16, 0
      %p52 = por %p50, %p51
      %p53 = scmp.ne.s32.totalorder %s45, %s47
      %p54 = scmp.eq.s32.totalorder %s21, 2
      %p55 = por %p53, %p54
      %p56 = scmp.ne.s32.totalorder %s47, %s48
      %p57 = scmp.eq.s32.totalorder %s21, 0
      %p58 = por %p56, %p57
      %p59 = scmp.ne.s32.totalorder %s47, %s48
      %p60 = scmp.eq.s32.totalorder %s22, 2
      %p61 = por %p59, %p60
      %p63 = scmp.ne.s32.totalorder %s48, %s62
      %p64 = scmp.eq.s32.totalorder %s22, 0
      %p65 = por %p63, %p64
      %s67 = sadd.s32 %s66, 1
      %p70 = scmp.eq.s32.totalorder %s16, 2
      %p71 = scmp.ne.s32.totalorder %s66, %s68
      %p72 = scmp.eq.s32.totalorder %s16, 0
      %p73 = por %p71, %p72
      %p74 = scmp.ne.s32.totalorder %s66, %s68
      %p75 = scmp.eq.s32.totalorder %s21, 2
      %p76 = por %p74, %p75
      %p77 = scmp.ne.s32.totalorder %s68, %s69
      %p78 = scmp.eq.s32.totalorder %s21, 0
      %p79 = por %p77, %p78
      %p80 = scmp.ne.s32.totalorder %s68, %s69
      %p81 = scmp.eq.s32.totalorder %s22, 2
      %p82 = por %p80, %p81
      %p84 = scmp.ne.s32.totalorder %s69, %s83
      %p85 = scmp.eq.s32.totalorder %s22, 0
      %p86 = por %p84, %p85
      %s88 = sadd.s32 %s87, 1
      %p91 = scmp.eq.s32.totalorder %s16, 2
      %p92 = scmp.ne.s32.totalorder %s87, %s89
      %p93 = scmp.eq.s32.totalorder %s16, 0
      %p94 = por %p92, %p93
      %p95 = scmp.ne.s32.totalorder %s87, %s89
      %p96 = scmp.eq.s32.totalorder %s21, 2
      %p97 = por %p95, %p96
      %p98 = scmp.ne.s32.totalorder %s89, %s90
      %p99 = scmp.eq.s32.totalorder %s21, 0
      %p100 = por %p98, %p99
      %p101 = scmp.ne.s32.totalorder %s89, %s90
      %p102 = scmp.eq.s32.totalorder %s22, 2
      %p103 = por %p101, %p102
      %p105 = scmp.ne.s32.totalorder %s90, %s104
      %p106 = scmp.eq.s32.totalorder %s22, 0
      %p107 = por %p105, %p106
      %s109 = sadd.s32 %s108, 1
      %p112 = scmp.eq.s32.totalorder %s16, 2
      %p113 = scmp.ne.s32.totalorder %s108, %s110
      %p114 = scmp.eq.s32.totalorder %s16, 0
      %p115 = por %p113, %p114
      %p116 = scmp.ne.s32.totalorder %s108, %s110
      %p117 = scmp.eq.s32.totalorder %s21, 2
      %p118 = por %p116, %p117
      %p119 = scmp.ne.s32.totalorder %s110, %s111
      %p120 = scmp.eq.s32.totalorder %s21, 0
      %p121 = por %p119, %p120
      %p122 = scmp.ne.s32.totalorder %s110, %s111
      %p123 = scmp.eq.s32.totalorder %s22, 2
      %p124 = por %p122, %p123
      %p126 = scmp.ne.s32.totalorder %s111, %s125
      %p127 = scmp.eq.s32.totalorder %s22, 0
      %p128 = por %p126, %p127
      %s130 = sadd.s32 %s129, 1
      %p133 = scmp.eq.s32.totalorder %s16, 2
      %p134 = scmp.ne.s32.totalorder %s129, %s131
      %p135 = scmp.eq.s32.totalorder %s16, 0
      %p136 = por %p134, %p135
      %p137 = scmp.ne.s32.totalorder %s129, %s131
      %p138 = scmp.eq.s32.totalorder %s21, 2
      %p139 = por %p137, %p138
      %p140 = scmp.ne.s32.totalorder %s131, %s132
      %p141 = scmp.eq.s32.totalorder %s21, 0
      %p142 = por %p140, %p141
      %p143 = scmp.ne.s32.totalorder %s131, %s132
      %p144 = scmp.eq.s32.totalorder %s22, 2
      %p145 = por %p143, %p144
      %p147 = scmp.ne.s32.totalorder %s132, %s146
      %p148 = scmp.eq.s32.totalorder %s22, 0
      %p149 = por %p147, %p148
      %s151 = sadd.s32 %s150, 1
      %p154 = scmp.eq.s32.totalorder %s16, 2
      %p155 = scmp.ne.s32.totalorder %s150, %s152
      %p156 = scmp.eq.s32.totalorder %s16, 0
      %p157 = por %p155, %p156
      %p158 = scmp.ne.s32.totalorder %s150, %s152
      %p159 = scmp.eq.s32.totalorder %s21, 2
      %p160 = por %p158, %p159
      %p161 = scmp.ne.s32.totalorder %s152, %s153
      %p162 = scmp.eq.s32.totalorder %s21, 0
      %p163 = por %p161, %p162
      %p164 = scmp.ne.s32.totalorder %s152, %s153
      %p165 = scmp.eq.s32.totalorder %s22, 2
      %p166 = por %p164, %p165
      %p168 = scmp.ne.s32.totalorder %s153, %s167
      %p169 = scmp.eq.s32.totalorder %s22, 0
      %p170 = por %p168, %p169
      %s172 = sadd.s32 %s171, 1
      %p175 = scmp.eq.s32.totalorder %s16, 2
      %p176 = scmp.ne.s32.totalorder %s171, %s173
      %p177 = scmp.eq.s32.totalorder %s16, 0
      %p178 = por %p176, %p177
      %p179 = scmp.ne.s32.totalorder %s171, %s173
      %p180 = scmp.eq.s32.totalorder %s21, 2
      %p181 = por %p179, %p180
      %p182 = scmp.ne.s32.totalorder %s173, %s174
      %p183 = scmp.eq.s32.totalorder %s21, 0
      %p184 = por %p182, %p183
      %p185 = scmp.ne.s32.totalorder %s173, %s174
      %p186 = scmp.eq.s32.totalorder %s22, 2
      %p187 = por %p185, %p186
      %p189 = scmp.ne.s32.totalorder %s174, %s188
      %p190 = scmp.eq.s32.totalorder %s22, 0
      %p191 = por %p189, %p190
      %s192 = ssub.s32 %s16, %s23
      %p193 = scmp.eq.s32.totalorder %s192, 0
      %s195 = sadd.s32 %s194, 1
      %s196 = scalar_select %p193, %s194, %s195
      %p199 = pneg %p193
      %p200 = scmp.eq.s32.totalorder %s16, 2
      %p201 = por %p199, %p200
      %p202 = scmp.ne.s32.totalorder %s194, %s197
      %p203 = scmp.eq.s32.totalorder %s16, 0
      %p204 = por %p202, %p203
      %p205 = scmp.ne.s32.totalorder %s194, %s197
      %p206 = scmp.eq.s32.totalorder %s21, 2
      %p207 = por %p205, %p206
      %p208 = scmp.ne.s32.totalorder %s197, %s198
      %p209 = scmp.eq.s32.totalorder %s21, 0
      %p210 = por %p208, %p209
      %p211 = scmp.ne.s32.totalorder %s197, %s198
      %p212 = scmp.eq.s32.totalorder %s22, 2
      %p213 = por %p211, %p212
      %p215 = scmp.ne.s32.totalorder %s198, %s214
      %p216 = scmp.eq.s32.totalorder %s22, 0
      %p217 = por %p215, %p216
      %s218 = ssub.s32 %s16, %s23
      %p219 = scmp.eq.s32.totalorder %s218, 0
      %s221 = sadd.s32 %s220, 1
      %s222 = scalar_select %p219, %s220, %s221
      %p225 = pneg %p219
      %p226 = scmp.eq.s32.totalorder %s16, 2
      %p227 = por %p225, %p226
      %p228 = scmp.ne.s32.totalorder %s220, %s223
      %p229 = scmp.eq.s32.totalorder %s16, 0
      %p230 = por %p228, %p229
      %p231 = scmp.ne.s32.totalorder %s220, %s223
      %p232 = scmp.eq.s32.totalorder %s21, 2
      %p233 = por %p231, %p232
      %p234 = scmp.ne.s32.totalorder %s223, %s224
      %p235 = scmp.eq.s32.totalorder %s21, 0
      %p236 = por %p234, %p235
      %p237 = scmp.ne.s32.totalorder %s223, %s224
      %p238 = scmp.eq.s32.totalorder %s22, 2
      %p239 = por %p237, %p238
      %p241 = scmp.ne.s32.totalorder %s224, %s240
      %p242 = scmp.eq.s32.totalorder %s22, 0
      %p243 = por %p241, %p242
      %p244 = scmp.le.s32.totalorder 1, %s16
      %p245 = scmp.lt.s32.totalorder %s16, 4
      %p246 = pnand %p244, %p245
      %p247 = pneg %p246
      // Predicated region
      $region9: #{polynomial_forward.1} parent=5 // pred_check
        _
      $region10: #{polynomial_forward.1} parent=5 // pred_check_branch
        %249 = sbr.rel (%p246) target = $region12
      $region11: #{polynomial_forward.1} parent=5 // pred_region
        %s250 = ssub.s32 %s16, 1
        // Predicated region
        $region13: #{polynomial_forward.1} parent=11 // pred_check
          %p251 = pneg %p37
        $region14: #{polynomial_forward.1} parent=11 // pred_check_branch
          %253 = sbr.rel (%p251) target = $region16
        $region15: #{polynomial_forward.1} parent=11 // pred_region
          %255 = vsyncadd [#allocation4], 0
          %s257 = sshll.u32 %s0, 4
          %s258 = int_to_ptr.vmem [resolvable:$true] %s257
          %260 = dma.vmem_to_smem %s258, 16, [#allocation3], [#allocation4]
        $region16: #{polynomial_forward.1} parent=11 // pred_fallthru
          _
        // Predicated region
        $region17: #{polynomial_forward.1} parent=11 // pred_check
          %p261 = pneg %p58
        $region18: #{polynomial_forward.1} parent=11 // pred_check_branch
          %263 = sbr.rel (%p261) target = $region20
        $region19: #{polynomial_forward.1} parent=11 // pred_region
          _
        $region20: #{polynomial_forward.1} parent=11 // pred_fallthru
          _
        // Predicated region
        $region21: #{polynomial_forward.1} parent=11 // pred_check
          %p264 = pneg %p79
        $region22: #{polynomial_forward.1} parent=11 // pred_check_branch
          %266 = sbr.rel (%p264) target = $region24
        $region23: #{polynomial_forward.1} parent=11 // pred_region
          _
        $region24: #{polynomial_forward.1} parent=11 // pred_fallthru
          _
        // Predicated region
        $region25: #{polynomial_forward.1} parent=11 // pred_check
          %p267 = pneg %p100
        $region26: #{polynomial_forward.1} parent=11 // pred_check_branch
          %269 = sbr.rel (%p267) target = $region28
        $region27: #{polynomial_forward.1} parent=11 // pred_region
          _
        $region28: #{polynomial_forward.1} parent=11 // pred_fallthru
          _
        // Predicated region
        $region29: #{polynomial_forward.1} parent=11 // pred_check
          %p270 = pneg %p121
        $region30: #{polynomial_forward.1} parent=11 // pred_check_branch
          %272 = sbr.rel (%p270) target = $region32
        $region31: #{polynomial_forward.1} parent=11 // pred_region
          _
        $region32: #{polynomial_forward.1} parent=11 // pred_fallthru
          _
        // Predicated region
        $region33: #{polynomial_forward.1} parent=11 // pred_check
          %p273 = pneg %p142
        $region34: #{polynomial_forward.1} parent=11 // pred_check_branch
          %275 = sbr.rel (%p273) target = $region36
        $region35: #{polynomial_forward.1} parent=11 // pred_region
          _
        $region36: #{polynomial_forward.1} parent=11 // pred_fallthru
          _
        // Predicated region
        $region37: #{polynomial_forward.1} parent=11 // pred_check
          %p276 = pneg %p163
        $region38: #{polynomial_forward.1} parent=11 // pred_check_branch
          %278 = sbr.rel (%p276) target = $region40
        $region39: #{polynomial_forward.1} parent=11 // pred_region
          _
        $region40: #{polynomial_forward.1} parent=11 // pred_fallthru
          _
        // Predicated region
        $region41: #{polynomial_forward.1} parent=11 // pred_check
          %p279 = pneg %p184
        $region42: #{polynomial_forward.1} parent=11 // pred_check_branch
          %281 = sbr.rel (%p279) target = $region44
        $region43: #{polynomial_forward.1} parent=11 // pred_region
          _
        $region44: #{polynomial_forward.1} parent=11 // pred_fallthru
          _
      $region12: #{polynomial_forward.1} parent=5 // pred_fallthru
        _
      %p282 = scmp.lt.s32.totalorder %s16, 3
      // Predicated region
      $region45: #{polynomial_forward.1} parent=5 // pred_check
        %p283 = pneg %p282
      $region46: #{polynomial_forward.1} parent=5 // pred_check_branch
        %285 = sbr.rel (%p283) target = $region48
      $region47: #{polynomial_forward.1} parent=5 // pred_region
        // Predicated region
        $region49: #{polynomial_forward.1} parent=47 // pred_check
          %p286 = pneg %p204
        $region50: #{polynomial_forward.1} parent=47 // pred_check_branch
          %288 = sbr.rel (%p286) target = $region52
        $region51: #{polynomial_forward.1} parent=47 // pred_region
          %s289 = sand.u32 %s194, 1
          %s290 = sand.u32 %s194, 1
          %s291 = smul.addr %s290, 128
          %s292 = scalar_lea.vmem [#allocation5], %s291
          %s293 = smul.u32 8, %s16
          %s294 = smul.addr %s293, 8
          %s295 = scalar_lea.vmem %s8, %s294
          // Predicated region
          $region53: #{polynomial_forward.1} parent=51 // pred_check
            _
          $region54: #{polynomial_forward.1} parent=51 // pred_check_branch
            %297 = sbr.rel (0) target = $region56
          $region55: #{polynomial_forward.1} parent=51 // pred_region
            // Predicated region
            $region57: #{polynomial_forward.1} parent=55 // pred_check
              _
            $region58: #{polynomial_forward.1} parent=55 // pred_check_branch
              %299 = sbr.rel (0) target = $region60
            $region59: #{polynomial_forward.1} parent=55 // pred_region
              // Predicated region
              $region72: #{polynomial_forward.1} parent=59 // pred_check
                _
              $region73: #{polynomial_forward.1} parent=59 // pred_check_branch
                %345 = sbr.rel (0) target = $region75
              $region74: #{polynomial_forward.1} parent=59 // pred_region
                loop: start=0, step=1, limit=1
                $region76: #{polynomial_forward.1} parent=74 // loop_pre_header
                  _
                $region77: #{polynomial_forward.1} parent=74 // loop_header
                  %s347 = sphi 0, %s351
                  %p348 = scmp.ge.s32.totalorder %s347, 1
                  %s352 = sphi %s295, %s295
                  %s353 = sphi %s292, %s292
                $region78: #{polynomial_forward.1} parent=74 // loop_header_branch
                  %350 = sbr.rel (%p348) target = $region82
                $region79: #{polynomial_forward.1} parent=74 // loop_body
                  %v354 = vld [vmem:[%s352] sm:$0xff]
                  %355 = vst [vmem:[%s353] sm:$0xff] %v354
                  %v356 = vld [vmem:[%s352 + $0x8] sm:$0xff]
                  %357 = vst [vmem:[%s353 + $0x8] sm:$0xff] %v356
                  %v358 = vld [vmem:[%s352 + $0x10] sm:$0xff]
                  %359 = vst [vmem:[%s353 + $0x10] sm:$0xff] %v358
                  %v360 = vld [vmem:[%s352 + $0x18] sm:$0xff]
                  %361 = vst [vmem:[%s353 + $0x18] sm:$0xff] %v360
                  %v362 = vld [vmem:[%s352 + $0x20] sm:$0xff]
                  %363 = vst [vmem:[%s353 + $0x20] sm:$0xff] %v362
                  %v364 = vld [vmem:[%s352 + $0x28] sm:$0xff]
                  %365 = vst [vmem:[%s353 + $0x28] sm:$0xff] %v364
                  %v366 = vld [vmem:[%s352 + $0x30] sm:$0xff]
                  %367 = vst [vmem:[%s353 + $0x30] sm:$0xff] %v366
                  %v368 = vld [vmem:[%s352 + $0x38] sm:$0xff]
                  %369 = vst [vmem:[%s353 + $0x38] sm:$0xff] %v368
                  %v370 = vld [vmem:[%s352 + $0xc0] sm:$0xff]
                  %371 = vst [vmem:[%s353 + $0x40] sm:$0xff] %v370
                  %v372 = vld [vmem:[%s352 + $0xc8] sm:$0xff]
                  %373 = vst [vmem:[%s353 + $0x48] sm:$0xff] %v372
                  %v374 = vld [vmem:[%s352 + $0xd0] sm:$0xff]
                  %375 = vst [vmem:[%s353 + $0x50] sm:$0xff] %v374
                  %v376 = vld [vmem:[%s352 + $0xd8] sm:$0xff]
                  %377 = vst [vmem:[%s353 + $0x58] sm:$0xff] %v376
                  %v378 = vld [vmem:[%s352 + $0xe0] sm:$0xff]
                  %379 = vst [vmem:[%s353 + $0x60] sm:$0xff] %v378
                  %v380 = vld [vmem:[%s352 + $0xe8] sm:$0xff]
                  %381 = vst [vmem:[%s353 + $0x68] sm:$0xff] %v380
                  %v382 = vld [vmem:[%s352 + $0xf0] sm:$0xff]
                  %383 = vst [vmem:[%s353 + $0x70] sm:$0xff] %v382
                  %v384 = vld [vmem:[%s352 + $0xf8] sm:$0xff]
                  %385 = vst [vmem:[%s353 + $0x78] sm:$0xff] %v384
                $region80: #{polynomial_forward.1} parent=74 // loop_footer
                  %s351 = sadd.s32 1, %s347
                $region81: #{polynomial_forward.1} parent=74 // loop_footer_branch
                  %346 = sbr.rel target = $region77
                $region82: #{polynomial_forward.1} parent=74 // loop_exit
                  _
              $region75: #{polynomial_forward.1} parent=59 // pred_fallthru
                _
              // Predicated region
              $region83: #{polynomial_forward.1} parent=59 // pred_check
                _
              $region84: #{polynomial_forward.1} parent=59 // pred_check_branch
                %387 = sbr.rel target = $region86
              $region85: #{polynomial_forward.1} parent=59 // pred_region
                _
              $region86: #{polynomial_forward.1} parent=59 // pred_fallthru
                _
            $region60: #{polynomial_forward.1} parent=55 // pred_fallthru
              _
            // Predicated region
            $region61: #{polynomial_forward.1} parent=55 // pred_check
              _
            $region62: #{polynomial_forward.1} parent=55 // pred_check_branch
              %301 = sbr.rel target = $region64
            $region63: #{polynomial_forward.1} parent=55 // pred_region
              %s303 = ssub.s32 256, 1
              loop: start=0, step=1, limit=1
              $region65: #{polynomial_forward.1} parent=63 // loop_pre_header
                _
              $region66: #{polynomial_forward.1} parent=63 // loop_header
                %s305 = sphi 0, %s309
                %p306 = scmp.ge.s32.totalorder %s305, 1
                %s310 = sphi %s295, %s295
                %s311 = sphi %s292, %s292
              $region67: #{polynomial_forward.1} parent=63 // loop_header_branch
                %308 = sbr.rel (%p306) target = $region71
              $region68: #{polynomial_forward.1} parent=63 // loop_body
                %v312 = vld [vmem:[%s310] sm:%s303]
                %313 = vst [vmem:[%s311] sm:%s303] %v312
                %v314 = vld [vmem:[%s310 + $0x8] sm:%s303]
                %315 = vst [vmem:[%s311 + $0x8] sm:%s303] %v314
                %v316 = vld [vmem:[%s310 + $0x10] sm:%s303]
                %317 = vst [vmem:[%s311 + $0x10] sm:%s303] %v316
                %v318 = vld [vmem:[%s310 + $0x18] sm:%s303]
                %319 = vst [vmem:[%s311 + $0x18] sm:%s303] %v318
                %v320 = vld [vmem:[%s310 + $0x20] sm:%s303]
                %321 = vst [vmem:[%s311 + $0x20] sm:%s303] %v320
                %v322 = vld [vmem:[%s310 + $0x28] sm:%s303]
                %323 = vst [vmem:[%s311 + $0x28] sm:%s303] %v322
                %v324 = vld [vmem:[%s310 + $0x30] sm:%s303]
                %325 = vst [vmem:[%s311 + $0x30] sm:%s303] %v324
                %v326 = vld [vmem:[%s310 + $0x38] sm:%s303]
                %327 = vst [vmem:[%s311 + $0x38] sm:%s303] %v326
                %v328 = vld [vmem:[%s310 + $0xc0] sm:%s303]
                %329 = vst [vmem:[%s311 + $0x40] sm:%s303] %v328
                %v330 = vld [vmem:[%s310 + $0xc8] sm:%s303]
                %331 = vst [vmem:[%s311 + $0x48] sm:%s303] %v330
                %v332 = vld [vmem:[%s310 + $0xd0] sm:%s303]
                %333 = vst [vmem:[%s311 + $0x50] sm:%s303] %v332
                %v334 = vld [vmem:[%s310 + $0xd8] sm:%s303]
                %335 = vst [vmem:[%s311 + $0x58] sm:%s303] %v334
                %v336 = vld [vmem:[%s310 + $0xe0] sm:%s303]
                %337 = vst [vmem:[%s311 + $0x60] sm:%s303] %v336
                %v338 = vld [vmem:[%s310 + $0xe8] sm:%s303]
                %339 = vst [vmem:[%s311 + $0x68] sm:%s303] %v338
                %v340 = vld [vmem:[%s310 + $0xf0] sm:%s303]
                %341 = vst [vmem:[%s311 + $0x70] sm:%s303] %v340
                %v342 = vld [vmem:[%s310 + $0xf8] sm:%s303]
                %343 = vst [vmem:[%s311 + $0x78] sm:%s303] %v342
              $region69: #{polynomial_forward.1} parent=63 // loop_footer
                %s309 = sadd.s32 1, %s305
              $region70: #{polynomial_forward.1} parent=63 // loop_footer_branch
                %304 = sbr.rel target = $region66
              $region71: #{polynomial_forward.1} parent=63 // loop_exit
                _
            $region64: #{polynomial_forward.1} parent=55 // pred_fallthru
              _
          $region56: #{polynomial_forward.1} parent=51 // pred_fallthru
            _
          %388 = vnop
        $region52: #{polynomial_forward.1} parent=47 // pred_fallthru
          _
      $region48: #{polynomial_forward.1} parent=5 // pred_fallthru
        _
      %p389 = scmp.le.s32.totalorder 1, %s16
      %p390 = scmp.lt.s32.totalorder %s16, 4
      %p391 = pnand %p389, %p390
      %p392 = pneg %p391
      // Predicated region
      $region87: #{polynomial_forward.1} parent=5 // pred_check
        _
      $region88: #{polynomial_forward.1} parent=5 // pred_check_branch
        %394 = sbr.rel (%p391) target = $region90
      $region89: #{polynomial_forward.1} parent=5 // pred_region
        %s395 = ssub.s32 %s16, 1
        // Predicated region
        $region91: #{polynomial_forward.1} parent=89 // pred_check
          %p396 = pneg %p37
        $region92: #{polynomial_forward.1} parent=89 // pred_check_branch
          %398 = sbr.rel (%p396) target = $region94
        $region93: #{polynomial_forward.1} parent=89 // pred_region
          %400 = dma.done [#allocation4], 16
        $region94: #{polynomial_forward.1} parent=89 // pred_fallthru
          _
        %s401 = sand.u32 %s197, 1
        %s402 = sand.u32 %s197, 1
        %s403 = smul.addr %s402, 128
        %s404 = scalar_lea.vmem [#allocation5], %s403
        // Predicated region
        $region95: #{polynomial_forward.1} parent=89 // pred_check
          %p405 = pneg %p210
        $region96: #{polynomial_forward.1} parent=89 // pred_check_branch
          %407 = sbr.rel (%p405) target = $region98
        $region97: #{polynomial_forward.1} parent=89 // pred_region
          _
        $region98: #{polynomial_forward.1} parent=89 // pred_fallthru
          _
        %408 = sfence
        %p409 = pneg %p37
        %p410 = pneg %p34
        %p411 = pneg %p58
        %p412 = pneg %p55
        %p413 = pneg %p79
        %p414 = pneg %p76
        %p415 = pneg %p100
        %p416 = pneg %p97
        %p417 = pneg %p121
        %p418 = pneg %p118
        %p419 = pneg %p142
        %p420 = pneg %p139
        %p421 = pneg %p163
        %p422 = pneg %p160
        %p423 = pneg %p184
        %p424 = pneg %p181
        %s425 = sand.u32 %s197, 1
        %s426 = sand.u32 %s197, 1
        %s427 = smul.addr %s426, 128
        %s428 = scalar_lea.vmem [#allocation5], %s427
        %p429 = pneg %p210
        %p430 = pneg %p207
        %p431 = pneg %p236
        %p432 = pneg %p233
        %s433 = smul.u32 8, %s21
        %p434 = scmp.lt.s32.totalorder %s433, 23
        %s435 = scalar_select %p434, %s433, 23
        %s436 = smul.addr %s435, 8
        %s437 = scalar_lea.vmem %s9, %s436
        %s438 = smul.u32 8, %s21
        %s439 = smul.u32 8, %s21
        %p440 = scmp.lt.s32.totalorder %s439, 23
        %s441 = scalar_select %p440, %s439, 23
        %s442 = smul.addr %s441, 8
        %s443 = scalar_lea.vmem %s9, %s442
        %s444 = smul.u32 8, %s21
        %p445 = scmp.eq.s32.totalorder %s21, 0
        // Predicated region
        $region99: #{polynomial_forward.1} parent=89 // pred_check
          %p446 = pneg %p445
        $region100: #{polynomial_forward.1} parent=89 // pred_check_branch
          %448 = sbr.rel (%p446) target = $region102
        $region101: #{polynomial_forward.1} parent=89 // pred_region
          %v449 = vld [vmem:[%s1] sm:$0xff]
          %v450 = vld [vmem:[%s2] sm:$0xff]
          %v451 = vld [vmem:[%s2 + $0x8] sm:$0xff]
          %v452 = vld [vmem:[%s2 + $0x10] sm:$0xff]
          %v453 = vld [vmem:[%s2 + $0x18] sm:$0xff]
          %v454 = vld [vmem:[%s2 + $0x20] sm:$0xff]
          %v455 = vld [vmem:[%s2 + $0x28] sm:$0xff]
          %v456 = vld [vmem:[%s2 + $0x30] sm:$0xff]
          %v457 = vld [vmem:[%s2 + $0x38] sm:$0xff]
          %v458 = vld [vmem:[%s2 + $0x40] sm:$0xff]
          %v459 = vld [vmem:[%s2 + $0x48] sm:$0xff]
          %v460 = vld [vmem:[%s2 + $0x50] sm:$0xff]
          %v461 = vld [vmem:[%s2 + $0x58] sm:$0xff]
          %v462 = vld [vmem:[%s2 + $0x60] sm:$0xff]
          %v463 = vld [vmem:[%s2 + $0x68] sm:$0xff]
          %v464 = vld [vmem:[%s2 + $0x70] sm:$0xff]
          %v465 = vld [vmem:[%s2 + $0x78] sm:$0xff]
          %v466 = vld [vmem:[%s3] sm:$0x1]
          %v468 = vperm.slane %v466, 0
          %470 = vmatpush.msra.mxu0 %v465
          %471 = vmatpush.msra.mxu0 %v464
          %472 = vmatpush.msra.mxu0 %v463
          %473 = vmatpush.msra.mxu0 %v462
          %474 = vmatpush.msra.mxu0 %v461
          %475 = vmatpush.msra.mxu0 %v460
          %476 = vmatpush.msra.mxu0 %v459
          %477 = vmatpush.msra.mxu0 %v458
          %478 = vmatpush.msra.mxu0 %v457
          %479 = vmatpush.msra.mxu0 %v456
          %480 = vmatpush.msra.mxu0 %v455
          %481 = vmatpush.msra.mxu0 %v454
          %482 = vmatpush.msra.mxu0 %v453
          %483 = vmatpush.msra.mxu0 %v452
          %484 = vmatpush.msra.mxu0 %v451
          %485 = vmatpush.msra.mxu0 %v450
          %486 = vmatmul.f32.gmra.mxu0 %v449
          %v487 = vpop.f32.mrf.mxu0
          %v488 = vadd.f32 %v468, %v487
          %489 = vdwg.mxu0
          %v490 = vtanh.pop %v488
          %v491 = vld [vmem:[%s4] sm:$0xff]
          %v492 = vld [vmem:[%s4 + $0x8] sm:$0xff]
          %v493 = vld [vmem:[%s4 + $0x10] sm:$0xff]
          %v494 = vld [vmem:[%s4 + $0x18] sm:$0xff]
          %v495 = vld [vmem:[%s4 + $0x20] sm:$0xff]
          %v496 = vld [vmem:[%s4 + $0x28] sm:$0xff]
          %v497 = vld [vmem:[%s4 + $0x30] sm:$0xff]
          %v498 = vld [vmem:[%s4 + $0x38] sm:$0xff]
          %v499 = vld [vmem:[%s4 + $0x40] sm:$0xff]
          %v500 = vld [vmem:[%s4 + $0x48] sm:$0xff]
          %v501 = vld [vmem:[%s4 + $0x50] sm:$0xff]
          %v502 = vld [vmem:[%s4 + $0x58] sm:$0xff]
          %v503 = vld [vmem:[%s4 + $0x60] sm:$0xff]
          %v504 = vld [vmem:[%s4 + $0x68] sm:$0xff]
          %v505 = vld [vmem:[%s4 + $0x70] sm:$0xff]
          %v506 = vld [vmem:[%s4 + $0x78] sm:$0xff]
          %v507 = vld [vmem:[%s5] sm:$0x1]
          %v509 = vperm.slane %v507, 0
          %511 = vmatpush.msra.mxu0 %v506
          %512 = vmatpush.msra.mxu0 %v505
          %513 = vmatpush.msra.mxu0 %v504
          %514 = vmatpush.msra.mxu0 %v503
          %515 = vmatpush.msra.mxu0 %v502
          %516 = vmatpush.msra.mxu0 %v501
          %517 = vmatpush.msra.mxu0 %v500
          %518 = vmatpush.msra.mxu0 %v499
          %519 = vmatpush.msra.mxu0 %v498
          %520 = vmatpush.msra.mxu0 %v497
          %521 = vmatpush.msra.mxu0 %v496
          %522 = vmatpush.msra.mxu0 %v495
          %523 = vmatpush.msra.mxu0 %v494
          %524 = vmatpush.msra.mxu0 %v493
          %525 = vmatpush.msra.mxu0 %v492
          %526 = vmatpush.msra.mxu0 %v491
          %527 = vmatmul.f32.gmra.mxu0 %v490
          %v528 = vpop.f32.mrf.mxu0
          %v529 = vadd.f32 %v509, %v528
          %530 = vdwg.mxu0
          %v531 = vtanh.pop %v529
          %s532 = scalar_lea.vmem %s4, 128
          %v533 = vld [vmem:[%s532] sm:$0xff]
          %v534 = vld [vmem:[%s532 + $0x8] sm:$0xff]
          %v535 = vld [vmem:[%s532 + $0x10] sm:$0xff]
          %v536 = vld [vmem:[%s532 + $0x18] sm:$0xff]
          %v537 = vld [vmem:[%s532 + $0x20] sm:$0xff]
          %v538 = vld [vmem:[%s532 + $0x28] sm:$0xff]
          %v539 = vld [vmem:[%s532 + $0x30] sm:$0xff]
          %v540 = vld [vmem:[%s532 + $0x38] sm:$0xff]
          %v541 = vld [vmem:[%s532 + $0x40] sm:$0xff]
          %v542 = vld [vmem:[%s532 + $0x48] sm:$0xff]
          %v543 = vld [vmem:[%s532 + $0x50] sm:$0xff]
          %v544 = vld [vmem:[%s532 + $0x58] sm:$0xff]
          %v545 = vld [vmem:[%s532 + $0x60] sm:$0xff]
          %v546 = vld [vmem:[%s532 + $0x68] sm:$0xff]
          %v547 = vld [vmem:[%s532 + $0x70] sm:$0xff]
          %v548 = vld [vmem:[%s532 + $0x78] sm:$0xff]
          %s549 = scalar_lea.vmem %s5, 1
          %v550 = vld [vmem:[%s549] sm:$0x1]
          %v552 = vperm.slane %v550, 0
          %554 = vmatpush.msra.mxu0 %v548
          %555 = vmatpush.msra.mxu0 %v547
          %556 = vmatpush.msra.mxu0 %v546
          %557 = vmatpush.msra.mxu0 %v545
          %558 = vmatpush.msra.mxu0 %v544
          %559 = vmatpush.msra.mxu0 %v543
          %560 = vmatpush.msra.mxu0 %v542
          %561 = vmatpush.msra.mxu0 %v541
          %562 = vmatpush.msra.mxu0 %v540
          %563 = vmatpush.msra.mxu0 %v539
          %564 = vmatpush.msra.mxu0 %v538
          %565 = vmatpush.msra.mxu0 %v537
          %566 = vmatpush.msra.mxu0 %v536
          %567 = vmatpush.msra.mxu0 %v535
          %568 = vmatpush.msra.mxu0 %v534
          %569 = vmatpush.msra.mxu0 %v533
          %570 = vmatmul.f32.gmra.mxu0 %v531
          %v571 = vpop.f32.mrf.mxu0
          %v572 = vadd.f32 %v552, %v571
          %573 = vdwg.mxu0
          %v574 = vtanh.pop %v572
          %v575 = vld [vmem:[%s6] sm:$0xff]
          %v576 = vld [vmem:[%s6 + $0x8] sm:$0xff]
          %v577 = vld [vmem:[%s6 + $0x10] sm:$0xff]
          %v578 = vld [vmem:[%s6 + $0x18] sm:$0xff]
          %v579 = vld [vmem:[%s6 + $0x20] sm:$0xff]
          %v580 = vld [vmem:[%s6 + $0x28] sm:$0xff]
          %v581 = vld [vmem:[%s6 + $0x30] sm:$0xff]
          %v582 = vld [vmem:[%s6 + $0x38] sm:$0xff]
          %v583 = vld [vmem:[%s6 + $0x40] sm:$0xff]
          %v584 = vld [vmem:[%s6 + $0x48] sm:$0xff]
          %v585 = vld [vmem:[%s6 + $0x50] sm:$0xff]
          %v586 = vld [vmem:[%s6 + $0x58] sm:$0xff]
          %v587 = vld [vmem:[%s6 + $0x60] sm:$0xff]
          %v588 = vld [vmem:[%s6 + $0x68] sm:$0xff]
          %v589 = vld [vmem:[%s6 + $0x70] sm:$0xff]
          %v590 = vld [vmem:[%s6 + $0x78] sm:$0xff]
          %v591 = vld [vmem:[%s7] sm:$0x1]
          %v593 = vperm.slane %v591, 0
          %595 = vmatpush.msra.mxu0 %v590
          %596 = vmatpush.msra.mxu0 %v589
          %597 = vmatpush.msra.mxu0 %v588
          %598 = vmatpush.msra.mxu0 %v587
          %599 = vmatpush.msra.mxu0 %v586
          %600 = vmatpush.msra.mxu0 %v585
          %601 = vmatpush.msra.mxu0 %v584
          %602 = vmatpush.msra.mxu0 %v583
          %603 = vmatpush.msra.mxu0 %v582
          %604 = vmatpush.msra.mxu0 %v581
          %605 = vmatpush.msra.mxu0 %v580
          %606 = vmatpush.msra.mxu0 %v579
          %607 = vmatpush.msra.mxu0 %v578
          %608 = vmatpush.msra.mxu0 %v577
          %609 = vmatpush.msra.mxu0 %v576
          %610 = vmatpush.msra.mxu0 %v575
          %611 = vmatmul.f32.gmra.mxu0 %v574
          %v612 = vpop.f32.mrf.mxu0
          %v613 = vadd.f32 %v593, %v612
          %614 = vdwg.mxu0
          %v615 = vmul.f32 %v613, -0.75
          %v616 = vmul.f32 %v613, -0.25
          %v618 = vrot.slane %v616, 1
          %v620 = vadd.f32 %v615, %v618
          %v622 = vrot.slane %v613, 2
          %v624 = vadd.f32 %v620, %v622
          %v625 = vrot.slane %v616, 3
          %v627 = vadd.f32 %v624, %v625
          %v628 = vmul.f32 %v613, 0.25
          %v630 = vrot.slane %v628, 4
          %v632 = vadd.f32 %v627, %v630
          %v633 = vrot.slane %v613, 5
          %v635 = vadd.f32 %v632, %v633
          %636 = vst [vmem:[#allocation2] sm:$0x1] %v635
          %v637 = vrot.slane %v628, 1
          %v639 = vadd.f32 %v616, %v637
          %v640 = vmul.f32 %v613, 0.0
          %v642 = vrot.slane %v640, 2
          %v644 = vadd.f32 %v639, %v642
          %v645 = vadd.f32 %v644, %v625
          %v646 = vadd.f32 %v645, %v630
          %v647 = vrot.slane %v640, 5
          %v649 = vadd.f32 %v646, %v647
          %650 = vst [vmem:[#allocation2 + $0x1] sm:$0x1] %v649
          %v651 = vmul.f32 %v613, 0.5
          %v653 = vrot.slane %v651, 1
          %v655 = vadd.f32 %v651, %v653
          %v656 = vmul.f32 %v613, -1.0
          %v658 = vrot.slane %v656, 2
          %v660 = vadd.f32 %v655, %v658
          %v661 = vmul.f32 %v613, -0.0
          %v663 = vrot.slane %v661, 3
          %v665 = vadd.f32 %v660, %v663
          %v666 = vrot.slane %v661, 4
          %v668 = vadd.f32 %v665, %v666
          %v669 = vrot.slane %v661, 5
          %v671 = vadd.f32 %v668, %v669
          %672 = vst [vmem:[#allocation2 + $0x2] sm:$0x1] %v671
          %v673 = vadd.f32 %v616, %v618
          %v674 = vadd.f32 %v673, %v642
          %v675 = vrot.slane %v628, 3
          %v677 = vadd.f32 %v674, %v675
          %v678 = vadd.f32 %v677, %v630
          %v679 = vadd.f32 %v678, %v647
          %680 = vst [vmem:[#allocation2 + $0x3] sm:$0x1] %v679
          %v681 = vadd.f32 %v628, %v618
          %v682 = vadd.f32 %v681, %v642
          %v683 = vadd.f32 %v682, %v625
          %v684 = vadd.f32 %v683, %v630
          %v685 = vadd.f32 %v684, %v647
          %686 = vst [vmem:[#allocation2 + $0x4] sm:$0x1] %v685
          %v687 = vrot.slane %v661, 1
          %v689 = vadd.f32 %v651, %v687
          %v690 = vrot.slane %v661, 2
          %v692 = vadd.f32 %v689, %v690
          %v693 = vrot.slane %v651, 3
          %v695 = vadd.f32 %v692, %v693
          %v696 = vadd.f32 %v695, %v666
          %v697 = vrot.slane %v656, 5
          %v699 = vadd.f32 %v696, %v697
          %700 = vst [vmem:[#allocation2 + $0x5] sm:$0x1] %v699
        $region102: #{polynomial_forward.1} parent=89 // pred_fallthru
          _
        %s701 = sld [smem:[#allocation3]]
        %s702 = sld [smem:[#allocation3 + $0x1]]
        %s703 = sld [smem:[#allocation3 + $0x2]]
        %s704 = sld [smem:[#allocation3 + $0x3]]
        %v705 = vld [vmem:[%s404] sm:$0xff]
        %v706 = vld [vmem:[%s404 + $0x8] sm:$0xff]
        %v707 = vld [vmem:[%s404 + $0x10] sm:$0xff]
        %v708 = vld [vmem:[%s404 + $0x18] sm:$0xff]
        %v709 = vld [vmem:[%s404 + $0x20] sm:$0xff]
        %v710 = vld [vmem:[%s404 + $0x28] sm:$0xff]
        %v711 = vld [vmem:[%s404 + $0x30] sm:$0xff]
        %v712 = vld [vmem:[%s404 + $0x38] sm:$0xff]
        %v713 = vstv %s701
        %v714 = vmul.f32 %v705, %v713
        %v715 = vmul.f32 %v706, %v713
        %v716 = vmul.f32 %v707, %v713
        %v717 = vmul.f32 %v708, %v713
        %v718 = vmul.f32 %v709, %v713
        %v719 = vmul.f32 %v710, %v713
        %v720 = vmul.f32 %v711, %v713
        %v721 = vmul.f32 %v712, %v713
        %v722 = vstv %s702
        %v723 = vadd.f32 %v714, %v722
        %v724 = vadd.f32 %v715, %v722
        %v725 = vadd.f32 %v716, %v722
        %v726 = vadd.f32 %v717, %v722
        %v727 = vadd.f32 %v718, %v722
        %v728 = vadd.f32 %v719, %v722
        %v729 = vadd.f32 %v720, %v722
        %v730 = vadd.f32 %v721, %v722
        %s731 = scalar_lea.vmem %s404, 64 [#allocation5]
        %v732 = vld [vmem:[%s731] sm:$0xff]
        %v733 = vld [vmem:[%s731 + $0x8] sm:$0xff]
        %v734 = vld [vmem:[%s731 + $0x10] sm:$0xff]
        %v735 = vld [vmem:[%s731 + $0x18] sm:$0xff]
        %v736 = vld [vmem:[%s731 + $0x20] sm:$0xff]
        %v737 = vld [vmem:[%s731 + $0x28] sm:$0xff]
        %v738 = vld [vmem:[%s731 + $0x30] sm:$0xff]
        %v739 = vld [vmem:[%s731 + $0x38] sm:$0xff]
        %v740 = vstv %s703
        %v741 = vmul.f32 %v732, %v740
        %v742 = vmul.f32 %v733, %v740
        %v743 = vmul.f32 %v734, %v740
        %v744 = vmul.f32 %v735, %v740
        %v745 = vmul.f32 %v736, %v740
        %v746 = vmul.f32 %v737, %v740
        %v747 = vmul.f32 %v738, %v740
        %v748 = vmul.f32 %v739, %v740
        %v749 = vstv %s704
        %v750 = vadd.f32 %v741, %v749
        %v751 = vadd.f32 %v742, %v749
        %v752 = vadd.f32 %v743, %v749
        %v753 = vadd.f32 %v744, %v749
        %v754 = vadd.f32 %v745, %v749
        %v755 = vadd.f32 %v746, %v749
        %v756 = vadd.f32 %v747, %v749
        %v757 = vadd.f32 %v748, %v749
        %v758 = vld [vmem:[#allocation2] sm:$0x1]
        %v759 = vld [vmem:[#allocation2 + $0x1] sm:$0x1]
        %v760 = vld [vmem:[#allocation2 + $0x2] sm:$0x1]
        %v761 = vld [vmem:[#allocation2 + $0x3] sm:$0x1]
        %v762 = vld [vmem:[#allocation2 + $0x4] sm:$0x1]
        %v763 = vld [vmem:[#allocation2 + $0x5] sm:$0x1]
        %v764 = vperm.slane %v760, 0
        %v765 = vmul.f32 %v764, %v723
        %v766 = vmul.f32 %v764, %v724
        %v767 = vmul.f32 %v764, %v725
        %v768 = vmul.f32 %v764, %v726
        %v769 = vmul.f32 %v764, %v727
        %v770 = vmul.f32 %v764, %v728
        %v771 = vmul.f32 %v764, %v729
        %v772 = vmul.f32 %v764, %v730
        %v773 = vperm.slane %v759, 0
        %v774 = vadd.f32 %v773, %v765
        %v775 = vadd.f32 %v773, %v766
        %v776 = vadd.f32 %v773, %v767
        %v777 = vadd.f32 %v773, %v768
        %v778 = vadd.f32 %v773, %v769
        %v779 = vadd.f32 %v773, %v770
        %v780 = vadd.f32 %v773, %v771
        %v781 = vadd.f32 %v773, %v772
        %v782 = vperm.slane %v762, 0
        %v783 = vmul.f32 %v782, %v750
        %v784 = vmul.f32 %v782, %v751
        %v785 = vmul.f32 %v782, %v752
        %v786 = vmul.f32 %v782, %v753
        %v787 = vmul.f32 %v782, %v754
        %v788 = vmul.f32 %v782, %v755
        %v789 = vmul.f32 %v782, %v756
        %v790 = vmul.f32 %v782, %v757
        %v791 = vadd.f32 %v774, %v783
        %v792 = vadd.f32 %v775, %v784
        %v793 = vadd.f32 %v776, %v785
        %v794 = vadd.f32 %v777, %v786
        %v795 = vadd.f32 %v778, %v787
        %v796 = vadd.f32 %v779, %v788
        %v797 = vadd.f32 %v780, %v789
        %v798 = vadd.f32 %v781, %v790
        %v799 = vmul.f32 %v723, %v791
        %v800 = vmul.f32 %v724, %v792
        %v801 = vmul.f32 %v725, %v793
        %v802 = vmul.f32 %v726, %v794
        %v803 = vmul.f32 %v727, %v795
        %v804 = vmul.f32 %v728, %v796
        %v805 = vmul.f32 %v729, %v797
        %v806 = vmul.f32 %v730, %v798
        %v807 = vperm.slane %v758, 0
        %v808 = vadd.f32 %v807, %v799
        %v809 = vadd.f32 %v807, %v800
        %v810 = vadd.f32 %v807, %v801
        %v811 = vadd.f32 %v807, %v802
        %v812 = vadd.f32 %v807, %v803
        %v813 = vadd.f32 %v807, %v804
        %v814 = vadd.f32 %v807, %v805
        %v815 = vadd.f32 %v807, %v806
        %v816 = vperm.slane %v763, 0
        %v817 = vmul.f32 %v816, %v750
        %v818 = vmul.f32 %v816, %v751
        %v819 = vmul.f32 %v816, %v752
        %v820 = vmul.f32 %v816, %v753
        %v821 = vmul.f32 %v816, %v754
        %v822 = vmul.f32 %v816, %v755
        %v823 = vmul.f32 %v816, %v756
        %v824 = vmul.f32 %v816, %v757
        %v825 = vperm.slane %v761, 0
        %v826 = vadd.f32 %v825, %v817
        %v827 = vadd.f32 %v825, %v818
        %v828 = vadd.f32 %v825, %v819
        %v829 = vadd.f32 %v825, %v820
        %v830 = vadd.f32 %v825, %v821
        %v831 = vadd.f32 %v825, %v822
        %v832 = vadd.f32 %v825, %v823
        %v833 = vadd.f32 %v825, %v824
        %v834 = vmul.f32 %v750, %v826
        %v835 = vmul.f32 %v751, %v827
        %v836 = vmul.f32 %v752, %v828
        %v837 = vmul.f32 %v753, %v829
        %v838 = vmul.f32 %v754, %v830
        %v839 = vmul.f32 %v755, %v831
        %v840 = vmul.f32 %v756, %v832
        %v841 = vmul.f32 %v757, %v833
        %v842 = vadd.f32 %v808, %v834
        %v843 = vadd.f32 %v809, %v835
        %v844 = vadd.f32 %v810, %v836
        %v845 = vadd.f32 %v811, %v837
        %v846 = vadd.f32 %v812, %v838
        %v847 = vadd.f32 %v813, %v839
        %v848 = vadd.f32 %v814, %v840
        %v849 = vadd.f32 %v815, %v841
        %850 = vst [vmem:[%s443] sm:$0xff] %v842
        %851 = vst [vmem:[%s443 + $0x8] sm:$0xff] %v843
        %852 = vst [vmem:[%s443 + $0x10] sm:$0xff] %v844
        %853 = vst [vmem:[%s443 + $0x18] sm:$0xff] %v845
        %854 = vst [vmem:[%s443 + $0x20] sm:$0xff] %v846
        %855 = vst [vmem:[%s443 + $0x28] sm:$0xff] %v847
        %856 = vst [vmem:[%s443 + $0x30] sm:$0xff] %v848
        %857 = vst [vmem:[%s443 + $0x38] sm:$0xff] %v849
        %s858 = smul.u32 8, %s21
        %p859 = scmp.lt.s32.totalorder %s858, 23
        %s860 = scalar_select %p859, %s858, 23
        %s861 = smul.addr %s860, 8
        %s862 = scalar_lea.vmem %s9, %s861
        // Predicated region
        $region103: #{polynomial_forward.1} parent=89 // pred_check
          %p863 = pneg %p233
        $region104: #{polynomial_forward.1} parent=89 // pred_check_branch
          %865 = sbr.rel (%p863) target = $region106
        $region105: #{polynomial_forward.1} parent=89 // pred_region
          %s866 = smul.u32 8, %s21
        $region106: #{polynomial_forward.1} parent=89 // pred_fallthru
          _
      $region90: #{polynomial_forward.1} parent=5 // pred_fallthru
        _
      %p867 = scmp.le.s32.totalorder 2, %s16
      // Predicated region
      $region107: #{polynomial_forward.1} parent=5 // pred_check
        %p868 = pneg %p867
      $region108: #{polynomial_forward.1} parent=5 // pred_check_branch
        %870 = sbr.rel (%p868) target = $region110
      $region109: #{polynomial_forward.1} parent=5 // pred_region
        %s871 = ssub.s32 %s16, 2
        // Predicated region
        $region111: #{polynomial_forward.1} parent=109 // pred_check
          %p872 = pneg %p239
        $region112: #{polynomial_forward.1} parent=109 // pred_check_branch
          %874 = sbr.rel (%p872) target = $region114
        $region113: #{polynomial_forward.1} parent=109 // pred_region
          %s875 = smul.u32 8, %s22
          %p876 = scmp.lt.s32.totalorder %s875, 23
          %s877 = scalar_select %p876, %s875, 23
          %s878 = smul.addr %s877, 8
          %s879 = scalar_lea.vmem %s9, %s878
        $region114: #{polynomial_forward.1} parent=109 // pred_fallthru
          _
      $region110: #{polynomial_forward.1} parent=5 // pred_fallthru
        _
    $region6: #{polynomial_forward.1} parent=1 // loop_footer
      %s20 = sadd.s32 1, %s16
    $region7: #{polynomial_forward.1} parent=1 // loop_footer_branch
      %15 = sbr.rel target = $region3
    $region8: #{polynomial_forward.1} parent=1 // loop_exit
      _
    %880 = vsyncpa [#allocation4], 1
    %s881 = scalar_lea.sflag [#allocation4], 1
    %882 = vsyncpa %s881, 1

</llo_original>
